<compile_context>
chip_gen: v7x
topology: tpu7x:2x2x1
jax: 0.10.0
libtpu: 0.0.40
codegen_flags: <defaults>
</compile_context>

<pallas_src>
import functools

import jax
import jax.numpy as jnp
import numpy as np
from jax.experimental import pallas as pl
from jax.experimental.pallas import tpu as pltpu


def _round_up(a, b):
    return (a + b - 1) // b * b


# ----------------------------------------------------------------------------
# Fused Pallas kernel: 3-stream block-diagonal GRU stack + latent encoders
# ----------------------------------------------------------------------------
def _fused_kernel(x_ref, wbf_ref, wf32_ref, enc_ref, o_ref,
                  gi_scr, stage_scr, *rest,
                  num_layers, L, NB, H, HP, din0,
                  gt_idx, hist_idx, win_offs, whh_offs):
    """One N-chunk of the fused forward.

    x_ref     : (L, NB, din0)      f32  time-major raw features (zero padded)
    wbf_ref   : (*, 3*HP)          bf16 stacked [w_in (l>=1) ; w_hh (l)] row blocks
    wf32_ref  : (din0+2*NL, 3*HP)  f32  rows[0:din0]   = layer-0 w_in (emb folded)
                                         rows[din0+2l]  = b_in folded (+ b_hh r/z)
                                         rows[din0+2l+1]= b_hh, n-gate slab only
    enc_ref   : (HP+8, OC)         f32  rows[0:HP] block-diag encoders, row[HP] bias
    o_ref     : (R, NB, OC)        f32  R=2 training (rows [gt ; hist]) / R=1 eval
    gi_scr    : (L*NB, 3*HP)       f32  hoisted per-layer input projection
    stage_scr : (R*NB, HP)         f32  captured hidden states
    rest      : (hseq_scr,)        bf16 (L*NB, HP) inter-layer h-seq, if NL > 1
    """
    hseq_scr = rest[0] if num_layers > 1 else None
    GP = HP
    GC = 3 * HP
    bf16 = jnp.bfloat16

    # Captured-hidden staging must start at zero: its pad lanes feed the
    # encoder matmul (against zero w_enc rows) and VMEM scratch is uninitialized.
    stage_scr[...] = jnp.zeros_like(stage_scr)

    # ---- layer-0 hoisted input projection: one MXU matmul for all timesteps
    x2 = x_ref[...].reshape(L * NB, din0)
    gi_scr[...] = (jnp.dot(x2, wf32_ref[0:din0, :],
                           preferred_element_type=jnp.float32)
                   + wf32_ref[din0:din0 + 1, :])

    for l in range(num_layers):
        last = (l == num_layers - 1)
        if l > 0:
            # hoisted projection for layer l (bf16 operands, f32 accumulate)
            w_in = wbf_ref[win_offs[l]:win_offs[l] + HP, :]
            gi_scr[...] = (jnp.dot(hseq_scr[...], w_in,
                                   preferred_element_type=jnp.float32)
                           + wf32_ref[din0 + 2 * l:din0 + 2 * l + 1, :])

        w_hh = wbf_ref[whh_offs[l]:whh_offs[l] + HP, :]                  # once, bf16
        b_hn = wf32_ref[din0 + 2 * l + 1:din0 + 2 * l + 2, 2 * GP:]     # (1, GP)

        h = jnp.zeros((NB, HP), jnp.float32)
        # TODO(synk): for L beyond a few dozen steps switch this static unroll to
        # lax.fori_loop(..., unroll=4) with pl.when-guarded capture writes.
        for t in range(L):
            gi = gi_scr[t * NB:(t + 1) * NB, :]                          # (NB, GC)
            gh = jnp.dot(h.astype(bf16), w_hh,
                         preferred_element_type=jnp.float32)            # bf16 MXU
            # r/z hidden biases are pre-folded into gi; one EUP slab for both.
            rz = jax.nn.sigmoid(gi[:, :2 * GP] + gh[:, :2 * GP])
            r, z = rz[:, :GP], rz[:, GP:]
            n = jnp.tanh(gi[:, 2 * GP:] + r * (gh[:, 2 * GP:] + b_hn))
            h = (1.0 - z) * n + z * h
            if not last:
                hseq_scr[t * NB:(t + 1) * NB, :] = h.astype(bf16)
            else:
                # stage only the consumed hidden slices (same lanes as source)
                for s in range(3):
                    if t == gt_idx[s]:
                        stage_scr[0:NB, s * H:(s + 1) * H] = h[:, s * H:(s + 1) * H]
                    if hist_idx is not None and t == hist_idx[s]:
                        stage_scr[NB:2 * NB, s * H:(s + 1) * H] = h[:, s * H:(s + 1) * H]

    # ---- fused latent encoders: single lane-dense matmul for [gt ; hist]
    out = (jnp.dot(stage_scr[...], enc_ref[0:HP, :],
                   preferred_element_type=jnp.float32)
           + enc_ref[HP:HP + 1, :])
    o_ref[...] = out.reshape(o_ref.shape)


def fused_forward(x, packed, *, L, N, D, gt_idx, hist_idx, n_chunk=256):
    """x: (L, N, DIN0) f32 time-major. Returns (R, N, 6*D) f32 encoder outputs."""
    H, HP, OC, DIN0 = packed['H'], packed['HP'], packed['OC'], packed['DIN0']
    NL = packed['num_layers']
    GC = 3 * HP
    R = 2 if hist_idx is not None else 1

    # rows per grid step: multiple of 8 sublanes, capped so scratch fits v7x VMEM
    NB = min(n_chunk, _round_up(N, 8))
    N_pad = _round_up(N, NB)
    if N_pad != N:
        x = jnp.pad(x, ((0, 0), (0, N_pad - N), (0, 0)))
    num_chunks = N_pad // NB

    kern = functools.partial(
        _fused_kernel, num_layers=NL, L=L, NB=NB, H=H, HP=HP, din0=DIN0,
        gt_idx=tuple(gt_idx),
        hist_idx=tuple(hist_idx) if hist_idx is not None else None,
        win_offs=packed['win_offs'], whh_offs=packed['whh_offs'])

    scratch = [pltpu.VMEM((L * NB, GC), jnp.float32),       # hoisted gate inputs
               pltpu.VMEM((R * NB, HP), jnp.float32)]       # captured h (gt/hist)
    if NL > 1:
        scratch.append(pltpu.VMEM((L * NB, HP), jnp.bfloat16))  # inter-layer h-seq

    out = pl.pallas_call(
        kern,
        out_shape=jax.ShapeDtypeStruct((R, N_pad, OC), jnp.float32),
        grid=(num_chunks,),
        in_specs=[
            pl.BlockSpec((L, NB, DIN0), lambda i: (0, i, 0)),
            pl.BlockSpec(packed['w_bf16'].shape, lambda i: (0, 0)),
            pl.BlockSpec(packed['w_f32'].shape, lambda i: (0, 0)),
            pl.BlockSpec(packed['w_enc'].shape, lambda i: (0, 0)),
        ],
        out_specs=pl.BlockSpec((R, NB, OC), lambda i: (0, i, 0)),
        scratch_shapes=scratch,
        compiler_params=pltpu.CompilerParams(
            dimension_semantics=("parallel",),        # independent N-chunks
            vmem_limit_bytes=32 * 1024 * 1024),       # explicit; chunked use <8 MiB
    )(x, packed['w_bf16'], packed['w_f32'], packed['w_enc'])
    return out[:, :N, :6 * D]


# ----------------------------------------------------------------------------
# Parameter construction (deterministic, PyTorch-style uniform init)
# Per-stream weights are stored transposed: w_ih (Din,3H), w_hh (H,3H),
# gate column order [r | z | n] (PyTorch order).
# ----------------------------------------------------------------------------
def init_weights(key, p):
    E = p['gru_input_size']
    H = p['gru_hidden_size']
    NL = p['gru_num_layers']
    D = p['latent_dim']
    keys = iter(jax.random.split(key, 128))

    def u(shape, bound):
        return jax.random.uniform(next(keys), shape, jnp.float32, -bound, bound)

    emb, gru, enc = [], [], []
    for _ in range(3):
        b_e = 1.0 / (2.0 ** 0.5)                       # Linear(2, E)
        emb.append((u((2, E), b_e), u((E,), b_e)))
        layers = []
        for l in range(NL):
            din = E if l == 0 else H
            b_g = 1.0 / (H ** 0.5)
            layers.append((
                u((din, 3 * H), b_g),   # weight_ih^T
                u((H, 3 * H), b_g),     # weight_hh^T
                u((3 * H,), b_g),       # bias_ih
                u((3 * H,), b_g),       # bias_hh
            ))
        gru.append(layers)
        b_l = 1.0 / (H ** 0.5)                          # Linear(H, 2*D)
        enc.append((u((H, 2 * D), b_l), u((2 * D,), b_l)))
    return dict(emb=emb, gru=gru, enc=enc)


# ----------------------------------------------------------------------------
# One-time weight packing: fold embedding into layer-0, fold r/z hidden biases
# into the input bias, build 128-lane gate-major block-diagonal weights and a
# lane-dense (OC=128) block-diagonal encoder.
# ----------------------------------------------------------------------------
def pack_weights(weights, params):
    H = params['gru_hidden_size']
    NL = params['gru_num_layers']
    D = params['latent_dim']
    HC = 3 * H
    HP = _round_up(HC, 128)          # padded combined hidden / gate-slab width
    GC = 3 * HP
    OC = _round_up(6 * D, 128)       # lane-dense encoder output width
    DIN0 = 8                         # 3 streams x 2 raw features, padded to 8

    # bf16 MXU weights: per layer [w_in (l>=1, HP rows)] then [w_hh (HP rows)]
    win_offs, whh_offs = [], []
    r = 0
    for l in range(NL):
        if l > 0:
            win_offs.append(r); r += HP
        else:
            win_offs.append(-1)      # layer-0 w_in lives in the f32 array
        whh_offs.append(r); r += HP
    w_bf = np.zeros((r, GC), np.float32)

    # f32 array: layer-0 w_in (emb folded) + 2 bias rows per layer
    w_f32 = np.zeros((DIN0 + 2 * NL, GC), np.float32)

    for l in range(NL):
        b_in_row = DIN0 + 2 * l
        b_hn_row = DIN0 + 2 * l + 1
        for s in range(3):
            w_ih, w_hh, b_ih, b_hh = [np.asarray(a) for a in weights['gru'][s][l]]
            if l == 0:
                we, be = [np.asarray(a) for a in weights['emb'][s]]
                w_eff = we @ w_ih                   # (2, 3H): fold Linear(2,E)
                b_eff = be @ w_ih + b_ih            # (3H,)
            else:
                w_eff, b_eff = w_ih, b_ih           # (H, 3H)
            for g in range(3):                      # gate-major: r | z | n
                c0 = g * HP + s * H
                if l == 0:
                    w_f32[2 * s:2 * s + 2, c0:c0 + H] = w_eff[:, g * H:(g + 1) * H]
                else:
                    o = win_offs[l]
                    w_bf[o + s * H:o + (s + 1) * H, c0:c0 + H] = \
                        w_eff[:, g * H:(g + 1) * H]
                o = whh_offs[l]
                w_bf[o + s * H:o + (s + 1) * H, c0:c0 + H] = \
                    w_hh[:, g * H:(g + 1) * H]
                if g < 2:       # fold r/z hidden bias into the input-side bias
                    w_f32[b_in_row, c0:c0 + H] = (b_eff[g * H:(g + 1) * H]
                                                  + b_hh[g * H:(g + 1) * H])
                else:           # n-gate: b_hn must stay inside r*(W_hn h + b_hn)
                    w_f32[b_in_row, c0:c0 + H] = b_eff[g * H:(g + 1) * H]
                    w_f32[b_hn_row, c0:c0 + H] = b_hh[g * H:(g + 1) * H]

    # block-diagonal latent encoders + bias row, padded to lane-dense OC columns
    w_enc = np.zeros((HP + 8, OC), np.float32)
    for s in range(3):
        wl, bl = [np.asarray(a) for a in weights['enc'][s]]
        w_enc[s * H:(s + 1) * H, s * 2 * D:(s + 1) * 2 * D] = wl
        w_enc[HP, s * 2 * D:(s + 1) * 2 * D] = bl

    return dict(
        w_bf16=jnp.asarray(w_bf).astype(jnp.bfloat16),
        w_f32=jnp.asarray(w_f32),
        w_enc=jnp.asarray(w_enc),
        num_layers=NL, H=H, HP=HP, OC=OC, DIN0=DIN0,
        win_offs=tuple(win_offs), whh_offs=tuple(whh_offs))


# ----------------------------------------------------------------------------
# Fused-kernel latent encodings (used by both training and eval paths)
# ----------------------------------------------------------------------------
def _encode(params, packed, trajectory, ground_truth=None):
    """Returns (mu_gt, logvar_gt[, mu_hist, logvar_hist]), each (B, P, 3*D)."""
    D = params['latent_dim']
    B, P, obs_len, _ = trajectory.shape
    N = B * P
    training = ground_truth is not None
    traj = (jnp.concatenate([trajectory, ground_truth], axis=2)
            if training else trajectory)
    T = traj.shape[2]
    vel = traj[:, :, 1:, :] - traj[:, :, :-1, :]
    acc = vel[:, :, 1:, :] - vel[:, :, :-1, :]
    pad_t = lambda a, k: jnp.pad(a, ((0, 0), (0, 0), (0, k), (0, 0)))
    # END-pad shorter streams with zeros (never read: streams are block-diagonal
    # and the GRU is causal), then pad 6 feature lanes -> DIN0.
    x = jnp.concatenate([traj, pad_t(vel, 1), pad_t(acc, 2)], axis=-1)   # (B,P,T,6)
    x = jnp.pad(x, ((0, 0), (0, 0), (0, 0), (0, packed['DIN0'] - 6)))
    x = x.reshape(N, T, packed['DIN0']).transpose(1, 0, 2)               # (T,N,DIN0)

    gt_idx = tuple(T - 1 - s for s in range(3))
    hist_idx = tuple(obs_len - 1 - s for s in range(3)) if training else None
    enc = fused_forward(x.astype(jnp.float32), packed, L=T, N=N, D=D,
                        gt_idx=gt_idx, hist_idx=hist_idx)                # (R,N,6D)

    def split(e):   # (N, 6D) -> mu (B,P,3D), logvar (B,P,3D)
        mu = jnp.concatenate([e[:, s * 2 * D:s * 2 * D + D] for s in range(3)], axis=1)
        lv = jnp.concatenate([e[:, s * 2 * D + D:(s + 1) * 2 * D] for s in range(3)],
                             axis=1)
        return mu.reshape(B, P, 3 * D), lv.reshape(B, P, 3 * D)

    if training:
        mu_gt, lv_gt = split(enc[0])
        mu_h, lv_h = split(enc[1])
        return mu_gt, lv_gt, mu_h, lv_h
    mu, lv = split(enc[0])
    return mu, lv


# ----------------------------------------------------------------------------
# Forward pass (mirrors LatentPredictor.forward)
# ----------------------------------------------------------------------------
def latent_predictor_forward(params, packed, trajectory, ground_truth=None,
                             sample_num=1, training=True, key=None):
    D = params['latent_dim']
    B, P, _, _ = trajectory.shape
    key = jax.random.PRNGKey(0) if key is None else key
    k_eps, k_noise = jax.random.split(key)

    if training:
        mu_gt, logvar_gt, mu_hist, logvar_hist = _encode(
            params, packed, trajectory, ground_truth)
        eps = jax.random.normal(k_eps, mu_gt.shape, jnp.float32)
        z_gt = mu_gt + eps * jnp.exp(0.5 * logvar_gt)    # reparam in plain jnp
        noise = jax.random.normal(k_noise, (B, P, D), jnp.float32)
        z = jnp.concatenate([z_gt, noise], axis=-1)
        return z, (mu_gt, logvar_gt, mu_hist, logvar_hist)
    else:
        mu, logvar = _encode(params, packed, trajectory, None)   # (B,P,3D)
        mu = jnp.tile(mu, (sample_num, 1, 1))
        logvar = jnp.tile(logvar, (sample_num, 1, 1))
        eps = jax.random.normal(k_eps, mu.shape, jnp.float32)
        z = mu + eps * jnp.exp(0.5 * logvar)
        noise = jax.random.normal(k_noise, (sample_num * B, P, D), jnp.float32)
        z = jnp.concatenate([z, noise], axis=-1)                 # (S*B, P, 4D)
        return z, None
# TODO(synk): nn.Dropout is declared in __init__ but never used in forward; omitted.


# ----------------------------------------------------------------------------
# Pure-JAX reference (unfused, per-stream, f32 HIGHEST) for sanity checks.
# ----------------------------------------------------------------------------
def _hp_dot(a, b):
    return jnp.dot(a, b, precision=jax.lax.Precision.HIGHEST)


def _reference_encodings(params, weights, trajectory, ground_truth=None):
    D = params['latent_dim']
    H = params['gru_hidden_size']
    B, P, obs_len, _ = trajectory.shape
    N = B * P
    training = ground_truth is not None
    traj = (jnp.concatenate([trajectory, ground_truth], axis=2)
            if training else trajectory)
    vel = traj[:, :, 1:, :] - traj[:, :, :-1, :]
    acc = vel[:, :, 1:, :] - vel[:, :, :-1, :]
    xs = [traj, vel, acc]
    mu_gt_p, lv_gt_p, mu_h_p, lv_h_p = [], [], [], []
    for s in range(3):
        x = xs[s].reshape(N, -1, 2)
        we, be = weights['emb'][s]
        h_in = _hp_dot(x, we) + be                         # (N, L_s, E)
        for (w_ih, w_hh, b_ih, b_hh) in weights['gru'][s]:
            L_s = h_in.shape[1]
            h = jnp.zeros((N, H), jnp.float32)
            outs = []
            for t in range(L_s):
                gi = _hp_dot(h_in[:, t, :], w_ih) + b_ih
                gh = _hp_dot(h, w_hh) + b_hh
                r = jax.nn.sigmoid(gi[:, :H] + gh[:, :H])
                z = jax.nn.sigmoid(gi[:, H:2 * H] + gh[:, H:2 * H])
                n = jnp.tanh(gi[:, 2 * H:] + r * gh[:, 2 * H:])
                h = (1.0 - z) * n + z * h
                outs.append(h)
            h_in = jnp.stack(outs, axis=1)                 # (N, L_s, H)
        wl, bl = weights['enc'][s]
        e_gt = _hp_dot(h_in[:, -1, :], wl) + bl
        mu_gt_p.append(e_gt[:, :D]); lv_gt_p.append(e_gt[:, D:])
        if training:
            e_h = _hp_dot(h_in[:, obs_len - 1 - s, :], wl) + bl
            mu_h_p.append(e_h[:, :D]); lv_h_p.append(e_h[:, D:])
    cat = lambda parts: jnp.concatenate(parts, axis=1).reshape(B, P, 3 * D)
    if training:
        return cat(mu_gt_p), cat(lv_gt_p), cat(mu_h_p), cat(lv_h_p)
    return cat(mu_gt_p), cat(lv_gt_p)


# ----------------------------------------------------------------------------
if __name__ == "__main__":
    params = dict(latent_dim=8, gru_input_size=16, gru_hidden_size=32,
                  gru_num_layers=1, dropout=0.1)
    B, P, obs_len, pred_len = 2, 4, 8, 4
    D = params['latent_dim']

    key = jax.random.PRNGKey(0)
    k_w, k_traj, k_gt, k_s1, k_s2 = jax.random.split(key, 5)
    weights = init_weights(k_w, params)
    packed = pack_weights(weights, params)
    trajectory = jax.random.normal(k_traj, (B, P, obs_len, 2), jnp.float32)
    ground_truth = jax.random.normal(k_gt, (B, P, pred_len, 2), jnp.float32)

    # ---- training-mode forward ---------------------------------------------
    z, stats = latent_predictor_forward(
        params, packed, trajectory, ground_truth, training=True, key=k_s1)
    jax.block_until_ready(z)
    assert z.shape == (B, P, 4 * D)
    assert all(s.shape == (B, P, 3 * D) for s in stats)

    # Numerical check vs. unfused f32 HIGHEST reference. The kernel uses bf16
    # MXU operands on the recurrent matmul, so the tolerance covers that drift;
    # a structural bug would be off by O(0.1-1).
    TOL = 2e-2
    ref = _reference_encodings(params, weights, trajectory, ground_truth)
    for got, want in zip(stats, ref):
        np.testing.assert_allclose(np.asarray(got), np.asarray(want),
                                   rtol=TOL, atol=TOL)

    # Short-horizon training check (pred_len=1 exercises minimal end padding).
    gt1 = ground_truth[:, :, :1, :]
    stats1 = _encode(params, packed, trajectory, gt1)
    ref1 = _reference_encodings(params, weights, trajectory, gt1)
    for got, want in zip(stats1, ref1):
        np.testing.assert_allclose(np.asarray(got), np.asarray(want),
                                   rtol=TOL, atol=TOL)

    # ---- eval-mode forward ---------------------------------------------------
    sample_num = 3
    z_eval, none_stats = latent_predictor_forward(
        params, packed, trajectory, None, sample_num=sample_num,
        training=False, key=k_s2)
    jax.block_until_ready(z_eval)
    assert z_eval.shape == (sample_num * B, P, 4 * D)
    assert none_stats is None

    mu_e, lv_e = _encode(params, packed, trajectory, None)
    mu_r, lv_r = _reference_encodings(params, weights, trajectory, None)
    np.testing.assert_allclose(np.asarray(mu_e), np.asarray(mu_r), rtol=TOL, atol=TOL)
    np.testing.assert_allclose(np.asarray(lv_e), np.asarray(lv_r), rtol=TOL, atol=TOL)

    print("KERNEL_OK")
</pallas_src>

<mosaic_0001>
module attributes {stable_mosaic.version = 11 : i64} {
  func.func @_fused_kernel(%arg0: i32, %arg1: memref<12x8x8xf32, #tpu.memory_space<vmem>>, %arg2: memref<128x384xbf16, #tpu.memory_space<vmem>>, %arg3: memref<10x384xf32, #tpu.memory_space<vmem>>, %arg4: memref<136x128xf32, #tpu.memory_space<vmem>>, %arg5: memref<2x8x128xf32, #tpu.memory_space<vmem>>, %arg6: memref<96x384xf32, #tpu.memory_space<vmem>>, %arg7: memref<16x128xf32, #tpu.memory_space<vmem>>) attributes {dimension_semantics = [#tpu.dimension_semantics<parallel>], iteration_bounds = array<i64: 1>, scalar_prefetch = 0 : i64, scratch_operands = 2 : i64, tpu.core_type = #tpu.core_type<tc>, window_params = [{transform_indices = @transform_0, window_bounds = array<i64: 12, 8, 8>}, {pipeline_mode = #tpu.pipeline_mode<synchronous>, transform_indices = @transform_1, window_bounds = array<i64: 128, 384>}, {pipeline_mode = #tpu.pipeline_mode<synchronous>, transform_indices = @transform_2, window_bounds = array<i64: 10, 384>}, {pipeline_mode = #tpu.pipeline_mode<synchronous>, transform_indices = @transform_3, window_bounds = array<i64: 136, 128>}, {transform_indices = @transform_4, window_bounds = array<i64: 2, 8, 128>}]} {
    %cst = arith.constant 0.000000e+00 : f32
    %0 = vector.broadcast %cst : f32 to vector<16x128xf32>
    %c0 = arith.constant 0 : index
    %c0_0 = arith.constant 0 : index
    %1 = vector.load %arg7[%c0, %c0_0] : memref<16x128xf32, #tpu.memory_space<vmem>>, vector<16x128xf32>
    tpu.vector_store %arg7[%c0, %c0_0], %0 {strides = array<i32>} : memref<16x128xf32, #tpu.memory_space<vmem>>, vector<16x128xf32>,
    %c0_1 = arith.constant 0 : index
    %c0_2 = arith.constant 0 : index
    %c0_3 = arith.constant 0 : index
    %2 = vector.load %arg1[%c0_1, %c0_2, %c0_3] : memref<12x8x8xf32, #tpu.memory_space<vmem>>, vector<12x8x8xf32>
    %3 = vector.shape_cast %2 : vector<12x8x8xf32> to vector<96x8xf32>
    %c0_4 = arith.constant 0 : index
    %c0_5 = arith.constant 0 : index
    %4 = vector.load %arg3[%c0_4, %c0_5] : memref<10x384xf32, #tpu.memory_space<vmem>>, vector<8x384xf32>
    %cst_6 = arith.constant dense<0.000000e+00> : vector<96x384xf32>
    %5 = tpu.matmul %3, %4, %cst_6 {dimension_numbers = #tpu.dot_dimension_numbers<[1], [0], [0], [1], [0, 0, 1, 1], [], []>} : vector<96x8xf32>, vector<8x384xf32>, vector<96x384xf32> -> vector<96x384xf32>
    %c8 = arith.constant 8 : index
    %c0_7 = arith.constant 0 : index
    %6 = vector.load %arg3[%c8, %c0_7] : memref<10x384xf32, #tpu.memory_space<vmem>>, vector<1x384xf32>
    %7 = vector.broadcast %6 : vector<1x384xf32> to vector<96x384xf32>
    %8 = arith.addf %5, %7 : vector<96x384xf32>
    %c0_8 = arith.constant 0 : index
    %c0_9 = arith.constant 0 : index
    %9 = vector.load %arg6[%c0_8, %c0_9] : memref<96x384xf32, #tpu.memory_space<vmem>>, vector<96x384xf32>
    tpu.vector_store %arg6[%c0_8, %c0_9], %8 {strides = array<i32>} : memref<96x384xf32, #tpu.memory_space<vmem>>, vector<96x384xf32>,
    %c0_10 = arith.constant 0 : index
    %c0_11 = arith.constant 0 : index
    %10 = vector.load %arg2[%c0_10, %c0_11] : memref<128x384xbf16, #tpu.memory_space<vmem>>, vector<128x384xbf16>
    %c9 = arith.constant 9 : index
    %c256 = arith.constant 256 : index
    %11 = vector.load %arg3[%c9, %c256] : memref<10x384xf32, #tpu.memory_space<vmem>>, vector<1x128xf32>
    %cst_12 = arith.constant 0.000000e+00 : f32
    %12 = vector.broadcast %cst_12 : f32 to vector<8x128xf32>
    %c0_13 = arith.constant 0 : index
    %c0_14 = arith.constant 0 : index
    %13 = vector.load %arg6[%c0_13, %c0_14] : memref<96x384xf32, #tpu.memory_space<vmem>>, vector<8x384xf32>
    %14 = arith.truncf %12 : vector<8x128xf32> to vector<8x128xbf16>
    %cst_15 = arith.constant dense<0.000000e+00> : vector<8x384xf32>
    %15 = tpu.matmul %14, %10, %cst_15 {dimension_numbers = #tpu.dot_dimension_numbers<[1], [0], [0], [1], [0, 0, 1, 1], [], []>} : vector<8x128xbf16>, vector<128x384xbf16>, vector<8x384xf32> -> vector<8x384xf32>
    %16 = vector.extract_strided_slice %13 {offsets = [0, 0], sizes = [8, 256], strides = [1, 1]} : vector<8x384xf32> to vector<8x256xf32>
    %17 = vector.extract_strided_slice %15 {offsets = [0, 0], sizes = [8, 256], strides = [1, 1]} : vector<8x384xf32> to vector<8x256xf32>
    %18 = arith.addf %16, %17 : vector<8x256xf32>
    %19 = arith.negf %18 : vector<8x256xf32>
    %20 = math.exp %19 : vector<8x256xf32>
    %cst_16 = arith.constant 1.000000e+00 : f32
    %21 = vector.broadcast %cst_16 : f32 to vector<8x256xf32>
    %22 = arith.addf %21, %20 : vector<8x256xf32>
    %23 = arith.divf %21, %22 : vector<8x256xf32>
    %24 = vector.extract_strided_slice %23 {offsets = [0, 0], sizes = [8, 128], strides = [1, 1]} : vector<8x256xf32> to vector<8x128xf32>
    %25 = vector.extract_strided_slice %23 {offsets = [0, 128], sizes = [8, 128], strides = [1, 1]} : vector<8x256xf32> to vector<8x128xf32>
    %26 = vector.extract_strided_slice %13 {offsets = [0, 256], sizes = [8, 128], strides = [1, 1]} : vector<8x384xf32> to vector<8x128xf32>
    %27 = vector.extract_strided_slice %15 {offsets = [0, 256], sizes = [8, 128], strides = [1, 1]} : vector<8x384xf32> to vector<8x128xf32>
    %28 = vector.broadcast %11 : vector<1x128xf32> to vector<8x128xf32>
    %29 = arith.addf %27, %28 : vector<8x128xf32>
    %30 = arith.mulf %24, %29 : vector<8x128xf32>
    %31 = arith.addf %26, %30 : vector<8x128xf32>
    %32 = math.tanh %31 : vector<8x128xf32>
    %cst_17 = arith.constant 1.000000e+00 : f32
    %33 = vector.broadcast %cst_17 : f32 to vector<8x128xf32>
    %34 = arith.subf %33, %25 : vector<8x128xf32>
    %35 = arith.mulf %34, %32 : vector<8x128xf32>
    %36 = arith.mulf %25, %12 : vector<8x128xf32>
    %37 = arith.addf %35, %36 : vector<8x128xf32>
    %c8_18 = arith.constant 8 : index
    %c0_19 = arith.constant 0 : index
    %38 = vector.load %arg6[%c8_18, %c0_19] : memref<96x384xf32, #tpu.memory_space<vmem>>, vector<8x384xf32>
    %39 = arith.truncf %37 : vector<8x128xf32> to vector<8x128xbf16>
    %cst_20 = arith.constant dense<0.000000e+00> : vector<8x384xf32>
    %40 = tpu.matmul %39, %10, %cst_20 {dimension_numbers = #tpu.dot_dimension_numbers<[1], [0], [0], [1], [0, 0, 1, 1], [], []>} : vector<8x128xbf16>, vector<128x384xbf16>, vector<8x384xf32> -> vector<8x384xf32>
    %41 = vector.extract_strided_slice %38 {offsets = [0, 0], sizes = [8, 256], strides = [1, 1]} : vector<8x384xf32> to vector<8x256xf32>
    %42 = vector.extract_strided_slice %40 {offsets = [0, 0], sizes = [8, 256], strides = [1, 1]} : vector<8x384xf32> to vector<8x256xf32>
    %43 = arith.addf %41, %42 : vector<8x256xf32>
    %44 = arith.negf %43 : vector<8x256xf32>
    %45 = math.exp %44 : vector<8x256xf32>
    %cst_21 = arith.constant 1.000000e+00 : f32
    %46 = vector.broadcast %cst_21 : f32 to vector<8x256xf32>
    %47 = arith.addf %46, %45 : vector<8x256xf32>
    %48 = arith.divf %46, %47 : vector<8x256xf32>
    %49 = vector.extract_strided_slice %48 {offsets = [0, 0], sizes = [8, 128], strides = [1, 1]} : vector<8x256xf32> to vector<8x128xf32>
    %50 = vector.extract_strided_slice %48 {offsets = [0, 128], sizes = [8, 128], strides = [1, 1]} : vector<8x256xf32> to vector<8x128xf32>
    %51 = vector.extract_strided_slice %38 {offsets = [0, 256], sizes = [8, 128], strides = [1, 1]} : vector<8x384xf32> to vector<8x128xf32>
    %52 = vector.extract_strided_slice %40 {offsets = [0, 256], sizes = [8, 128], strides = [1, 1]} : vector<8x384xf32> to vector<8x128xf32>
    %53 = vector.broadcast %11 : vector<1x128xf32> to vector<8x128xf32>
    %54 = arith.addf %52, %53 : vector<8x128xf32>
    %55 = arith.mulf %49, %54 : vector<8x128xf32>
    %56 = arith.addf %51, %55 : vector<8x128xf32>
    %57 = math.tanh %56 : vector<8x128xf32>
    %cst_22 = arith.constant 1.000000e+00 : f32
    %58 = vector.broadcast %cst_22 : f32 to vector<8x128xf32>
    %59 = arith.subf %58, %50 : vector<8x128xf32>
    %60 = arith.mulf %59, %57 : vector<8x128xf32>
    %61 = arith.mulf %50, %37 : vector<8x128xf32>
    %62 = arith.addf %60, %61 : vector<8x128xf32>
    %c16 = arith.constant 16 : index
    %c0_23 = arith.constant 0 : index
    %63 = vector.load %arg6[%c16, %c0_23] : memref<96x384xf32, #tpu.memory_space<vmem>>, vector<8x384xf32>
    %64 = arith.truncf %62 : vector<8x128xf32> to vector<8x128xbf16>
    %cst_24 = arith.constant dense<0.000000e+00> : vector<8x384xf32>
    %65 = tpu.matmul %64, %10, %cst_24 {dimension_numbers = #tpu.dot_dimension_numbers<[1], [0], [0], [1], [0, 0, 1, 1], [], []>} : vector<8x128xbf16>, vector<128x384xbf16>, vector<8x384xf32> -> vector<8x384xf32>
    %66 = vector.extract_strided_slice %63 {offsets = [0, 0], sizes = [8, 256], strides = [1, 1]} : vector<8x384xf32> to vector<8x256xf32>
    %67 = vector.extract_strided_slice %65 {offsets = [0, 0], sizes = [8, 256], strides = [1, 1]} : vector<8x384xf32> to vector<8x256xf32>
    %68 = arith.addf %66, %67 : vector<8x256xf32>
    %69 = arith.negf %68 : vector<8x256xf32>
    %70 = math.exp %69 : vector<8x256xf32>
    %cst_25 = arith.constant 1.000000e+00 : f32
    %71 = vector.broadcast %cst_25 : f32 to vector<8x256xf32>
    %72 = arith.addf %71, %70 : vector<8x256xf32>
    %73 = arith.divf %71, %72 : vector<8x256xf32>
    %74 = vector.extract_strided_slice %73 {offsets = [0, 0], sizes = [8, 128], strides = [1, 1]} : vector<8x256xf32> to vector<8x128xf32>
    %75 = vector.extract_strided_slice %73 {offsets = [0, 128], sizes = [8, 128], strides = [1, 1]} : vector<8x256xf32> to vector<8x128xf32>
    %76 = vector.extract_strided_slice %63 {offsets = [0, 256], sizes = [8, 128], strides = [1, 1]} : vector<8x384xf32> to vector<8x128xf32>
    %77 = vector.extract_strided_slice %65 {offsets = [0, 256], sizes = [8, 128], strides = [1, 1]} : vector<8x384xf32> to vector<8x128xf32>
    %78 = vector.broadcast %11 : vector<1x128xf32> to vector<8x128xf32>
    %79 = arith.addf %77, %78 : vector<8x128xf32>
    %80 = arith.mulf %74, %79 : vector<8x128xf32>
    %81 = arith.addf %76, %80 : vector<8x128xf32>
    %82 = math.tanh %81 : vector<8x128xf32>
    %cst_26 = arith.constant 1.000000e+00 : f32
    %83 = vector.broadcast %cst_26 : f32 to vector<8x128xf32>
    %84 = arith.subf %83, %75 : vector<8x128xf32>
    %85 = arith.mulf %84, %82 : vector<8x128xf32>
    %86 = arith.mulf %75, %62 : vector<8x128xf32>
    %87 = arith.addf %85, %86 : vector<8x128xf32>
    %c24 = arith.constant 24 : index
    %c0_27 = arith.constant 0 : index
    %88 = vector.load %arg6[%c24, %c0_27] : memref<96x384xf32, #tpu.memory_space<vmem>>, vector<8x384xf32>
    %89 = arith.truncf %87 : vector<8x128xf32> to vector<8x128xbf16>
    %cst_28 = arith.constant dense<0.000000e+00> : vector<8x384xf32>
    %90 = tpu.matmul %89, %10, %cst_28 {dimension_numbers = #tpu.dot_dimension_numbers<[1], [0], [0], [1], [0, 0, 1, 1], [], []>} : vector<8x128xbf16>, vector<128x384xbf16>, vector<8x384xf32> -> vector<8x384xf32>
    %91 = vector.extract_strided_slice %88 {offsets = [0, 0], sizes = [8, 256], strides = [1, 1]} : vector<8x384xf32> to vector<8x256xf32>
    %92 = vector.extract_strided_slice %90 {offsets = [0, 0], sizes = [8, 256], strides = [1, 1]} : vector<8x384xf32> to vector<8x256xf32>
    %93 = arith.addf %91, %92 : vector<8x256xf32>
    %94 = arith.negf %93 : vector<8x256xf32>
    %95 = math.exp %94 : vector<8x256xf32>
    %cst_29 = arith.constant 1.000000e+00 : f32
    %96 = vector.broadcast %cst_29 : f32 to vector<8x256xf32>
    %97 = arith.addf %96, %95 : vector<8x256xf32>
    %98 = arith.divf %96, %97 : vector<8x256xf32>
    %99 = vector.extract_strided_slice %98 {offsets = [0, 0], sizes = [8, 128], strides = [1, 1]} : vector<8x256xf32> to vector<8x128xf32>
    %100 = vector.extract_strided_slice %98 {offsets = [0, 128], sizes = [8, 128], strides = [1, 1]} : vector<8x256xf32> to vector<8x128xf32>
    %101 = vector.extract_strided_slice %88 {offsets = [0, 256], sizes = [8, 128], strides = [1, 1]} : vector<8x384xf32> to vector<8x128xf32>
    %102 = vector.extract_strided_slice %90 {offsets = [0, 256], sizes = [8, 128], strides = [1, 1]} : vector<8x384xf32> to vector<8x128xf32>
    %103 = vector.broadcast %11 : vector<1x128xf32> to vector<8x128xf32>
    %104 = arith.addf %102, %103 : vector<8x128xf32>
    %105 = arith.mulf %99, %104 : vector<8x128xf32>
    %106 = arith.addf %101, %105 : vector<8x128xf32>
    %107 = math.tanh %106 : vector<8x128xf32>
    %cst_30 = arith.constant 1.000000e+00 : f32
    %108 = vector.broadcast %cst_30 : f32 to vector<8x128xf32>
    %109 = arith.subf %108, %100 : vector<8x128xf32>
    %110 = arith.mulf %109, %107 : vector<8x128xf32>
    %111 = arith.mulf %100, %87 : vector<8x128xf32>
    %112 = arith.addf %110, %111 : vector<8x128xf32>
    %c32 = arith.constant 32 : index
    %c0_31 = arith.constant 0 : index
    %113 = vector.load %arg6[%c32, %c0_31] : memref<96x384xf32, #tpu.memory_space<vmem>>, vector<8x384xf32>
    %114 = arith.truncf %112 : vector<8x128xf32> to vector<8x128xbf16>
    %cst_32 = arith.constant dense<0.000000e+00> : vector<8x384xf32>
    %115 = tpu.matmul %114, %10, %cst_32 {dimension_numbers = #tpu.dot_dimension_numbers<[1], [0], [0], [1], [0, 0, 1, 1], [], []>} : vector<8x128xbf16>, vector<128x384xbf16>, vector<8x384xf32> -> vector<8x384xf32>
    %116 = vector.extract_strided_slice %113 {offsets = [0, 0], sizes = [8, 256], strides = [1, 1]} : vector<8x384xf32> to vector<8x256xf32>
    %117 = vector.extract_strided_slice %115 {offsets = [0, 0], sizes = [8, 256], strides = [1, 1]} : vector<8x384xf32> to vector<8x256xf32>
    %118 = arith.addf %116, %117 : vector<8x256xf32>
    %119 = arith.negf %118 : vector<8x256xf32>
    %120 = math.exp %119 : vector<8x256xf32>
    %cst_33 = arith.constant 1.000000e+00 : f32
    %121 = vector.broadcast %cst_33 : f32 to vector<8x256xf32>
    %122 = arith.addf %121, %120 : vector<8x256xf32>
    %123 = arith.divf %121, %122 : vector<8x256xf32>
    %124 = vector.extract_strided_slice %123 {offsets = [0, 0], sizes = [8, 128], strides = [1, 1]} : vector<8x256xf32> to vector<8x128xf32>
    %125 = vector.extract_strided_slice %123 {offsets = [0, 128], sizes = [8, 128], strides = [1, 1]} : vector<8x256xf32> to vector<8x128xf32>
    %126 = vector.extract_strided_slice %113 {offsets = [0, 256], sizes = [8, 128], strides = [1, 1]} : vector<8x384xf32> to vector<8x128xf32>
    %127 = vector.extract_strided_slice %115 {offsets = [0, 256], sizes = [8, 128], strides = [1, 1]} : vector<8x384xf32> to vector<8x128xf32>
    %128 = vector.broadcast %11 : vector<1x128xf32> to vector<8x128xf32>
    %129 = arith.addf %127, %128 : vector<8x128xf32>
    %130 = arith.mulf %124, %129 : vector<8x128xf32>
    %131 = arith.addf %126, %130 : vector<8x128xf32>
    %132 = math.tanh %131 : vector<8x128xf32>
    %cst_34 = arith.constant 1.000000e+00 : f32
    %133 = vector.broadcast %cst_34 : f32 to vector<8x128xf32>
    %134 = arith.subf %133, %125 : vector<8x128xf32>
    %135 = arith.mulf %134, %132 : vector<8x128xf32>
    %136 = arith.mulf %125, %112 : vector<8x128xf32>
    %137 = arith.addf %135, %136 : vector<8x128xf32>
    %c40 = arith.constant 40 : index
    %c0_35 = arith.constant 0 : index
    %138 = vector.load %arg6[%c40, %c0_35] : memref<96x384xf32, #tpu.memory_space<vmem>>, vector<8x384xf32>
    %139 = arith.truncf %137 : vector<8x128xf32> to vector<8x128xbf16>
    %cst_36 = arith.constant dense<0.000000e+00> : vector<8x384xf32>
    %140 = tpu.matmul %139, %10, %cst_36 {dimension_numbers = #tpu.dot_dimension_numbers<[1], [0], [0], [1], [0, 0, 1, 1], [], []>} : vector<8x128xbf16>, vector<128x384xbf16>, vector<8x384xf32> -> vector<8x384xf32>
    %141 = vector.extract_strided_slice %138 {offsets = [0, 0], sizes = [8, 256], strides = [1, 1]} : vector<8x384xf32> to vector<8x256xf32>
    %142 = vector.extract_strided_slice %140 {offsets = [0, 0], sizes = [8, 256], strides = [1, 1]} : vector<8x384xf32> to vector<8x256xf32>
    %143 = arith.addf %141, %142 : vector<8x256xf32>
    %144 = arith.negf %143 : vector<8x256xf32>
    %145 = math.exp %144 : vector<8x256xf32>
    %cst_37 = arith.constant 1.000000e+00 : f32
    %146 = vector.broadcast %cst_37 : f32 to vector<8x256xf32>
    %147 = arith.addf %146, %145 : vector<8x256xf32>
    %148 = arith.divf %146, %147 : vector<8x256xf32>
    %149 = vector.extract_strided_slice %148 {offsets = [0, 0], sizes = [8, 128], strides = [1, 1]} : vector<8x256xf32> to vector<8x128xf32>
    %150 = vector.extract_strided_slice %148 {offsets = [0, 128], sizes = [8, 128], strides = [1, 1]} : vector<8x256xf32> to vector<8x128xf32>
    %151 = vector.extract_strided_slice %138 {offsets = [0, 256], sizes = [8, 128], strides = [1, 1]} : vector<8x384xf32> to vector<8x128xf32>
    %152 = vector.extract_strided_slice %140 {offsets = [0, 256], sizes = [8, 128], strides = [1, 1]} : vector<8x384xf32> to vector<8x128xf32>
    %153 = vector.broadcast %11 : vector<1x128xf32> to vector<8x128xf32>
    %154 = arith.addf %152, %153 : vector<8x128xf32>
    %155 = arith.mulf %149, %154 : vector<8x128xf32>
    %156 = arith.addf %151, %155 : vector<8x128xf32>
    %157 = math.tanh %156 : vector<8x128xf32>
    %cst_38 = arith.constant 1.000000e+00 : f32
    %158 = vector.broadcast %cst_38 : f32 to vector<8x128xf32>
    %159 = arith.subf %158, %150 : vector<8x128xf32>
    %160 = arith.mulf %159, %157 : vector<8x128xf32>
    %161 = arith.mulf %150, %137 : vector<8x128xf32>
    %162 = arith.addf %160, %161 : vector<8x128xf32>
    %163 = vector.extract_strided_slice %162 {offsets = [0, 64], sizes = [8, 32], strides = [1, 1]} : vector<8x128xf32> to vector<8x32xf32>
    %c8_39 = arith.constant 8 : index
    %c64 = arith.constant 64 : index
    %164 = vector.load %arg7[%c8_39, %c64] : memref<16x128xf32, #tpu.memory_space<vmem>>, vector<8x32xf32>
    tpu.vector_store %arg7[%c8_39, %c64], %163 {strides = array<i32>} : memref<16x128xf32, #tpu.memory_space<vmem>>, vector<8x32xf32>,
    %c48 = arith.constant 48 : index
    %c0_40 = arith.constant 0 : index
    %165 = vector.load %arg6[%c48, %c0_40] : memref<96x384xf32, #tpu.memory_space<vmem>>, vector<8x384xf32>
    %166 = arith.truncf %162 : vector<8x128xf32> to vector<8x128xbf16>
    %cst_41 = arith.constant dense<0.000000e+00> : vector<8x384xf32>
    %167 = tpu.matmul %166, %10, %cst_41 {dimension_numbers = #tpu.dot_dimension_numbers<[1], [0], [0], [1], [0, 0, 1, 1], [], []>} : vector<8x128xbf16>, vector<128x384xbf16>, vector<8x384xf32> -> vector<8x384xf32>
    %168 = vector.extract_strided_slice %165 {offsets = [0, 0], sizes = [8, 256], strides = [1, 1]} : vector<8x384xf32> to vector<8x256xf32>
    %169 = vector.extract_strided_slice %167 {offsets = [0, 0], sizes = [8, 256], strides = [1, 1]} : vector<8x384xf32> to vector<8x256xf32>
    %170 = arith.addf %168, %169 : vector<8x256xf32>
    %171 = arith.negf %170 : vector<8x256xf32>
    %172 = math.exp %171 : vector<8x256xf32>
    %cst_42 = arith.constant 1.000000e+00 : f32
    %173 = vector.broadcast %cst_42 : f32 to vector<8x256xf32>
    %174 = arith.addf %173, %172 : vector<8x256xf32>
    %175 = arith.divf %173, %174 : vector<8x256xf32>
    %176 = vector.extract_strided_slice %175 {offsets = [0, 0], sizes = [8, 128], strides = [1, 1]} : vector<8x256xf32> to vector<8x128xf32>
    %177 = vector.extract_strided_slice %175 {offsets = [0, 128], sizes = [8, 128], strides = [1, 1]} : vector<8x256xf32> to vector<8x128xf32>
    %178 = vector.extract_strided_slice %165 {offsets = [0, 256], sizes = [8, 128], strides = [1, 1]} : vector<8x384xf32> to vector<8x128xf32>
    %179 = vector.extract_strided_slice %167 {offsets = [0, 256], sizes = [8, 128], strides = [1, 1]} : vector<8x384xf32> to vector<8x128xf32>
    %180 = vector.broadcast %11 : vector<1x128xf32> to vector<8x128xf32>
    %181 = arith.addf %179, %180 : vector<8x128xf32>
    %182 = arith.mulf %176, %181 : vector<8x128xf32>
    %183 = arith.addf %178, %182 : vector<8x128xf32>
    %184 = math.tanh %183 : vector<8x128xf32>
    %cst_43 = arith.constant 1.000000e+00 : f32
    %185 = vector.broadcast %cst_43 : f32 to vector<8x128xf32>
    %186 = arith.subf %185, %177 : vector<8x128xf32>
    %187 = arith.mulf %186, %184 : vector<8x128xf32>
    %188 = arith.mulf %177, %162 : vector<8x128xf32>
    %189 = arith.addf %187, %188 : vector<8x128xf32>
    %190 = vector.extract_strided_slice %189 {offsets = [0, 32], sizes = [8, 32], strides = [1, 1]} : vector<8x128xf32> to vector<8x32xf32>
    %c8_44 = arith.constant 8 : index
    %c32_45 = arith.constant 32 : index
    %191 = vector.load %arg7[%c8_44, %c32_45] : memref<16x128xf32, #tpu.memory_space<vmem>>, vector<8x32xf32>
    tpu.vector_store %arg7[%c8_44, %c32_45], %190 {strides = array<i32>} : memref<16x128xf32, #tpu.memory_space<vmem>>, vector<8x32xf32>,
    %c56 = arith.constant 56 : index
    %c0_46 = arith.constant 0 : index
    %192 = vector.load %arg6[%c56, %c0_46] : memref<96x384xf32, #tpu.memory_space<vmem>>, vector<8x384xf32>
    %193 = arith.truncf %189 : vector<8x128xf32> to vector<8x128xbf16>
    %cst_47 = arith.constant dense<0.000000e+00> : vector<8x384xf32>
    %194 = tpu.matmul %193, %10, %cst_47 {dimension_numbers = #tpu.dot_dimension_numbers<[1], [0], [0], [1], [0, 0, 1, 1], [], []>} : vector<8x128xbf16>, vector<128x384xbf16>, vector<8x384xf32> -> vector<8x384xf32>
    %195 = vector.extract_strided_slice %192 {offsets = [0, 0], sizes = [8, 256], strides = [1, 1]} : vector<8x384xf32> to vector<8x256xf32>
    %196 = vector.extract_strided_slice %194 {offsets = [0, 0], sizes = [8, 256], strides = [1, 1]} : vector<8x384xf32> to vector<8x256xf32>
    %197 = arith.addf %195, %196 : vector<8x256xf32>
    %198 = arith.negf %197 : vector<8x256xf32>
    %199 = math.exp %198 : vector<8x256xf32>
    %cst_48 = arith.constant 1.000000e+00 : f32
    %200 = vector.broadcast %cst_48 : f32 to vector<8x256xf32>
    %201 = arith.addf %200, %199 : vector<8x256xf32>
    %202 = arith.divf %200, %201 : vector<8x256xf32>
    %203 = vector.extract_strided_slice %202 {offsets = [0, 0], sizes = [8, 128], strides = [1, 1]} : vector<8x256xf32> to vector<8x128xf32>
    %204 = vector.extract_strided_slice %202 {offsets = [0, 128], sizes = [8, 128], strides = [1, 1]} : vector<8x256xf32> to vector<8x128xf32>
    %205 = vector.extract_strided_slice %192 {offsets = [0, 256], sizes = [8, 128], strides = [1, 1]} : vector<8x384xf32> to vector<8x128xf32>
    %206 = vector.extract_strided_slice %194 {offsets = [0, 256], sizes = [8, 128], strides = [1, 1]} : vector<8x384xf32> to vector<8x128xf32>
    %207 = vector.broadcast %11 : vector<1x128xf32> to vector<8x128xf32>
    %208 = arith.addf %206, %207 : vector<8x128xf32>
    %209 = arith.mulf %203, %208 : vector<8x128xf32>
    %210 = arith.addf %205, %209 : vector<8x128xf32>
    %211 = math.tanh %210 : vector<8x128xf32>
    %cst_49 = arith.constant 1.000000e+00 : f32
    %212 = vector.broadcast %cst_49 : f32 to vector<8x128xf32>
    %213 = arith.subf %212, %204 : vector<8x128xf32>
    %214 = arith.mulf %213, %211 : vector<8x128xf32>
    %215 = arith.mulf %204, %189 : vector<8x128xf32>
    %216 = arith.addf %214, %215 : vector<8x128xf32>
    %217 = vector.extract_strided_slice %216 {offsets = [0, 0], sizes = [8, 32], strides = [1, 1]} : vector<8x128xf32> to vector<8x32xf32>
    %c8_50 = arith.constant 8 : index
    %c0_51 = arith.constant 0 : index
    %218 = vector.load %arg7[%c8_50, %c0_51] : memref<16x128xf32, #tpu.memory_space<vmem>>, vector<8x32xf32>
    tpu.vector_store %arg7[%c8_50, %c0_51], %217 {strides = array<i32>} : memref<16x128xf32, #tpu.memory_space<vmem>>, vector<8x32xf32>,
    %c64_52 = arith.constant 64 : index
    %c0_53 = arith.constant 0 : index
    %219 = vector.load %arg6[%c64_52, %c0_53] : memref<96x384xf32, #tpu.memory_space<vmem>>, vector<8x384xf32>
    %220 = arith.truncf %216 : vector<8x128xf32> to vector<8x128xbf16>
    %cst_54 = arith.constant dense<0.000000e+00> : vector<8x384xf32>
    %221 = tpu.matmul %220, %10, %cst_54 {dimension_numbers = #tpu.dot_dimension_numbers<[1], [0], [0], [1], [0, 0, 1, 1], [], []>} : vector<8x128xbf16>, vector<128x384xbf16>, vector<8x384xf32> -> vector<8x384xf32>
    %222 = vector.extract_strided_slice %219 {offsets = [0, 0], sizes = [8, 256], strides = [1, 1]} : vector<8x384xf32> to vector<8x256xf32>
    %223 = vector.extract_strided_slice %221 {offsets = [0, 0], sizes = [8, 256], strides = [1, 1]} : vector<8x384xf32> to vector<8x256xf32>
    %224 = arith.addf %222, %223 : vector<8x256xf32>
    %225 = arith.negf %224 : vector<8x256xf32>
    %226 = math.exp %225 : vector<8x256xf32>
    %cst_55 = arith.constant 1.000000e+00 : f32
    %227 = vector.broadcast %cst_55 : f32 to vector<8x256xf32>
    %228 = arith.addf %227, %226 : vector<8x256xf32>
    %229 = arith.divf %227, %228 : vector<8x256xf32>
    %230 = vector.extract_strided_slice %229 {offsets = [0, 0], sizes = [8, 128], strides = [1, 1]} : vector<8x256xf32> to vector<8x128xf32>
    %231 = vector.extract_strided_slice %229 {offsets = [0, 128], sizes = [8, 128], strides = [1, 1]} : vector<8x256xf32> to vector<8x128xf32>
    %232 = vector.extract_strided_slice %219 {offsets = [0, 256], sizes = [8, 128], strides = [1, 1]} : vector<8x384xf32> to vector<8x128xf32>
    %233 = vector.extract_strided_slice %221 {offsets = [0, 256], sizes = [8, 128], strides = [1, 1]} : vector<8x384xf32> to vector<8x128xf32>
    %234 = vector.broadcast %11 : vector<1x128xf32> to vector<8x128xf32>
    %235 = arith.addf %233, %234 : vector<8x128xf32>
    %236 = arith.mulf %230, %235 : vector<8x128xf32>
    %237 = arith.addf %232, %236 : vector<8x128xf32>
    %238 = math.tanh %237 : vector<8x128xf32>
    %cst_56 = arith.constant 1.000000e+00 : f32
    %239 = vector.broadcast %cst_56 : f32 to vector<8x128xf32>
    %240 = arith.subf %239, %231 : vector<8x128xf32>
    %241 = arith.mulf %240, %238 : vector<8x128xf32>
    %242 = arith.mulf %231, %216 : vector<8x128xf32>
    %243 = arith.addf %241, %242 : vector<8x128xf32>
    %c72 = arith.constant 72 : index
    %c0_57 = arith.constant 0 : index
    %244 = vector.load %arg6[%c72, %c0_57] : memref<96x384xf32, #tpu.memory_space<vmem>>, vector<8x384xf32>
    %245 = arith.truncf %243 : vector<8x128xf32> to vector<8x128xbf16>
    %cst_58 = arith.constant dense<0.000000e+00> : vector<8x384xf32>
    %246 = tpu.matmul %245, %10, %cst_58 {dimension_numbers = #tpu.dot_dimension_numbers<[1], [0], [0], [1], [0, 0, 1, 1], [], []>} : vector<8x128xbf16>, vector<128x384xbf16>, vector<8x384xf32> -> vector<8x384xf32>
    %247 = vector.extract_strided_slice %244 {offsets = [0, 0], sizes = [8, 256], strides = [1, 1]} : vector<8x384xf32> to vector<8x256xf32>
    %248 = vector.extract_strided_slice %246 {offsets = [0, 0], sizes = [8, 256], strides = [1, 1]} : vector<8x384xf32> to vector<8x256xf32>
    %249 = arith.addf %247, %248 : vector<8x256xf32>
    %250 = arith.negf %249 : vector<8x256xf32>
    %251 = math.exp %250 : vector<8x256xf32>
    %cst_59 = arith.constant 1.000000e+00 : f32
    %252 = vector.broadcast %cst_59 : f32 to vector<8x256xf32>
    %253 = arith.addf %252, %251 : vector<8x256xf32>
    %254 = arith.divf %252, %253 : vector<8x256xf32>
    %255 = vector.extract_strided_slice %254 {offsets = [0, 0], sizes = [8, 128], strides = [1, 1]} : vector<8x256xf32> to vector<8x128xf32>
    %256 = vector.extract_strided_slice %254 {offsets = [0, 128], sizes = [8, 128], strides = [1, 1]} : vector<8x256xf32> to vector<8x128xf32>
    %257 = vector.extract_strided_slice %244 {offsets = [0, 256], sizes = [8, 128], strides = [1, 1]} : vector<8x384xf32> to vector<8x128xf32>
    %258 = vector.extract_strided_slice %246 {offsets = [0, 256], sizes = [8, 128], strides = [1, 1]} : vector<8x384xf32> to vector<8x128xf32>
    %259 = vector.broadcast %11 : vector<1x128xf32> to vector<8x128xf32>
    %260 = arith.addf %258, %259 : vector<8x128xf32>
    %261 = arith.mulf %255, %260 : vector<8x128xf32>
    %262 = arith.addf %257, %261 : vector<8x128xf32>
    %263 = math.tanh %262 : vector<8x128xf32>
    %cst_60 = arith.constant 1.000000e+00 : f32
    %264 = vector.broadcast %cst_60 : f32 to vector<8x128xf32>
    %265 = arith.subf %264, %256 : vector<8x128xf32>
    %266 = arith.mulf %265, %263 : vector<8x128xf32>
    %267 = arith.mulf %256, %243 : vector<8x128xf32>
    %268 = arith.addf %266, %267 : vector<8x128xf32>
    %269 = vector.extract_strided_slice %268 {offsets = [0, 64], sizes = [8, 32], strides = [1, 1]} : vector<8x128xf32> to vector<8x32xf32>
    %c0_61 = arith.constant 0 : index
    %c64_62 = arith.constant 64 : index
    %270 = vector.load %arg7[%c0_61, %c64_62] : memref<16x128xf32, #tpu.memory_space<vmem>>, vector<8x32xf32>
    tpu.vector_store %arg7[%c0_61, %c64_62], %269 {strides = array<i32>} : memref<16x128xf32, #tpu.memory_space<vmem>>, vector<8x32xf32>,
    %c80 = arith.constant 80 : index
    %c0_63 = arith.constant 0 : index
    %271 = vector.load %arg6[%c80, %c0_63] : memref<96x384xf32, #tpu.memory_space<vmem>>, vector<8x384xf32>
    %272 = arith.truncf %268 : vector<8x128xf32> to vector<8x128xbf16>
    %cst_64 = arith.constant dense<0.000000e+00> : vector<8x384xf32>
    %273 = tpu.matmul %272, %10, %cst_64 {dimension_numbers = #tpu.dot_dimension_numbers<[1], [0], [0], [1], [0, 0, 1, 1], [], []>} : vector<8x128xbf16>, vector<128x384xbf16>, vector<8x384xf32> -> vector<8x384xf32>
    %274 = vector.extract_strided_slice %271 {offsets = [0, 0], sizes = [8, 256], strides = [1, 1]} : vector<8x384xf32> to vector<8x256xf32>
    %275 = vector.extract_strided_slice %273 {offsets = [0, 0], sizes = [8, 256], strides = [1, 1]} : vector<8x384xf32> to vector<8x256xf32>
    %276 = arith.addf %274, %275 : vector<8x256xf32>
    %277 = arith.negf %276 : vector<8x256xf32>
    %278 = math.exp %277 : vector<8x256xf32>
    %cst_65 = arith.constant 1.000000e+00 : f32
    %279 = vector.broadcast %cst_65 : f32 to vector<8x256xf32>
    %280 = arith.addf %279, %278 : vector<8x256xf32>
    %281 = arith.divf %279, %280 : vector<8x256xf32>
    %282 = vector.extract_strided_slice %281 {offsets = [0, 0], sizes = [8, 128], strides = [1, 1]} : vector<8x256xf32> to vector<8x128xf32>
    %283 = vector.extract_strided_slice %281 {offsets = [0, 128], sizes = [8, 128], strides = [1, 1]} : vector<8x256xf32> to vector<8x128xf32>
    %284 = vector.extract_strided_slice %271 {offsets = [0, 256], sizes = [8, 128], strides = [1, 1]} : vector<8x384xf32> to vector<8x128xf32>
    %285 = vector.extract_strided_slice %273 {offsets = [0, 256], sizes = [8, 128], strides = [1, 1]} : vector<8x384xf32> to vector<8x128xf32>
    %286 = vector.broadcast %11 : vector<1x128xf32> to vector<8x128xf32>
    %287 = arith.addf %285, %286 : vector<8x128xf32>
    %288 = arith.mulf %282, %287 : vector<8x128xf32>
    %289 = arith.addf %284, %288 : vector<8x128xf32>
    %290 = math.tanh %289 : vector<8x128xf32>
    %cst_66 = arith.constant 1.000000e+00 : f32
    %291 = vector.broadcast %cst_66 : f32 to vector<8x128xf32>
    %292 = arith.subf %291, %283 : vector<8x128xf32>
    %293 = arith.mulf %292, %290 : vector<8x128xf32>
    %294 = arith.mulf %283, %268 : vector<8x128xf32>
    %295 = arith.addf %293, %294 : vector<8x128xf32>
    %296 = vector.extract_strided_slice %295 {offsets = [0, 32], sizes = [8, 32], strides = [1, 1]} : vector<8x128xf32> to vector<8x32xf32>
    %c0_67 = arith.constant 0 : index
    %c32_68 = arith.constant 32 : index
    %297 = vector.load %arg7[%c0_67, %c32_68] : memref<16x128xf32, #tpu.memory_space<vmem>>, vector<8x32xf32>
    tpu.vector_store %arg7[%c0_67, %c32_68], %296 {strides = array<i32>} : memref<16x128xf32, #tpu.memory_space<vmem>>, vector<8x32xf32>,
    %c88 = arith.constant 88 : index
    %c0_69 = arith.constant 0 : index
    %298 = vector.load %arg6[%c88, %c0_69] : memref<96x384xf32, #tpu.memory_space<vmem>>, vector<8x384xf32>
    %299 = arith.truncf %295 : vector<8x128xf32> to vector<8x128xbf16>
    %cst_70 = arith.constant dense<0.000000e+00> : vector<8x384xf32>
    %300 = tpu.matmul %299, %10, %cst_70 {dimension_numbers = #tpu.dot_dimension_numbers<[1], [0], [0], [1], [0, 0, 1, 1], [], []>} : vector<8x128xbf16>, vector<128x384xbf16>, vector<8x384xf32> -> vector<8x384xf32>
    %301 = vector.extract_strided_slice %298 {offsets = [0, 0], sizes = [8, 256], strides = [1, 1]} : vector<8x384xf32> to vector<8x256xf32>
    %302 = vector.extract_strided_slice %300 {offsets = [0, 0], sizes = [8, 256], strides = [1, 1]} : vector<8x384xf32> to vector<8x256xf32>
    %303 = arith.addf %301, %302 : vector<8x256xf32>
    %304 = arith.negf %303 : vector<8x256xf32>
    %305 = math.exp %304 : vector<8x256xf32>
    %cst_71 = arith.constant 1.000000e+00 : f32
    %306 = vector.broadcast %cst_71 : f32 to vector<8x256xf32>
    %307 = arith.addf %306, %305 : vector<8x256xf32>
    %308 = arith.divf %306, %307 : vector<8x256xf32>
    %309 = vector.extract_strided_slice %308 {offsets = [0, 0], sizes = [8, 128], strides = [1, 1]} : vector<8x256xf32> to vector<8x128xf32>
    %310 = vector.extract_strided_slice %308 {offsets = [0, 128], sizes = [8, 128], strides = [1, 1]} : vector<8x256xf32> to vector<8x128xf32>
    %311 = vector.extract_strided_slice %298 {offsets = [0, 256], sizes = [8, 128], strides = [1, 1]} : vector<8x384xf32> to vector<8x128xf32>
    %312 = vector.extract_strided_slice %300 {offsets = [0, 256], sizes = [8, 128], strides = [1, 1]} : vector<8x384xf32> to vector<8x128xf32>
    %313 = vector.broadcast %11 : vector<1x128xf32> to vector<8x128xf32>
    %314 = arith.addf %312, %313 : vector<8x128xf32>
    %315 = arith.mulf %309, %314 : vector<8x128xf32>
    %316 = arith.addf %311, %315 : vector<8x128xf32>
    %317 = math.tanh %316 : vector<8x128xf32>
    %cst_72 = arith.constant 1.000000e+00 : f32
    %318 = vector.broadcast %cst_72 : f32 to vector<8x128xf32>
    %319 = arith.subf %318, %310 : vector<8x128xf32>
    %320 = arith.mulf %319, %317 : vector<8x128xf32>
    %321 = arith.mulf %310, %295 : vector<8x128xf32>
    %322 = arith.addf %320, %321 : vector<8x128xf32>
    %323 = vector.extract_strided_slice %322 {offsets = [0, 0], sizes = [8, 32], strides = [1, 1]} : vector<8x128xf32> to vector<8x32xf32>
    %c0_73 = arith.constant 0 : index
    %c0_74 = arith.constant 0 : index
    %324 = vector.load %arg7[%c0_73, %c0_74] : memref<16x128xf32, #tpu.memory_space<vmem>>, vector<8x32xf32>
    tpu.vector_store %arg7[%c0_73, %c0_74], %323 {strides = array<i32>} : memref<16x128xf32, #tpu.memory_space<vmem>>, vector<8x32xf32>,
    %c0_75 = arith.constant 0 : index
    %c0_76 = arith.constant 0 : index
    %325 = vector.load %arg7[%c0_75, %c0_76] : memref<16x128xf32, #tpu.memory_space<vmem>>, vector<16x128xf32>
    %c0_77 = arith.constant 0 : index
    %c0_78 = arith.constant 0 : index
    %326 = vector.load %arg4[%c0_77, %c0_78] : memref<136x128xf32, #tpu.memory_space<vmem>>, vector<128x128xf32>
    %cst_79 = arith.constant dense<0.000000e+00> : vector<16x128xf32>
    %327 = tpu.matmul %325, %326, %cst_79 {dimension_numbers = #tpu.dot_dimension_numbers<[1], [0], [0], [1], [0, 0, 1, 1], [], []>} : vector<16x128xf32>, vector<128x128xf32>, vector<16x128xf32> -> vector<16x128xf32>
    %c128 = arith.constant 128 : index
    %c0_80 = arith.constant 0 : index
    %328 = vector.load %arg4[%c128, %c0_80] : memref<136x128xf32, #tpu.memory_space<vmem>>, vector<1x128xf32>
    %329 = vector.broadcast %328 : vector<1x128xf32> to vector<16x128xf32>
    %330 = arith.addf %327, %329 : vector<16x128xf32>
    %331 = vector.shape_cast %330 : vector<16x128xf32> to vector<2x8x128xf32>
    %c0_81 = arith.constant 0 : index
    %c0_82 = arith.constant 0 : index
    %c0_83 = arith.constant 0 : index
    %332 = vector.load %arg5[%c0_81, %c0_82, %c0_83] : memref<2x8x128xf32, #tpu.memory_space<vmem>>, vector<2x8x128xf32>
    tpu.vector_store %arg5[%c0_81, %c0_82, %c0_83], %331 {strides = array<i32>} : memref<2x8x128xf32, #tpu.memory_space<vmem>>, vector<2x8x128xf32>,
    return
  }
  func.func @transform_0(%arg0: i32) -> (i32, i32, i32) {
    %c0_i32 = arith.constant 0 : i32
    %c0_i32_0 = arith.constant 0 : i32
    %c0_i32_1 = arith.constant 0 : i32
    return %c0_i32, %arg0, %c0_i32_0 : i32, i32, i32
  }
  func.func @transform_1(%arg0: i32) -> (i32, i32) {
    %c0_i32 = arith.constant 0 : i32
    %c0_i32_0 = arith.constant 0 : i32
    %c0_i32_1 = arith.constant 0 : i32
    return %c0_i32, %c0_i32_0 : i32, i32
  }
  func.func @transform_2(%arg0: i32) -> (i32, i32) {
    %c0_i32 = arith.constant 0 : i32
    %c0_i32_0 = arith.constant 0 : i32
    %c0_i32_1 = arith.constant 0 : i32
    return %c0_i32, %c0_i32_0 : i32, i32
  }
  func.func @transform_3(%arg0: i32) -> (i32, i32) {
    %c0_i32 = arith.constant 0 : i32
    %c0_i32_0 = arith.constant 0 : i32
    %c0_i32_1 = arith.constant 0 : i32
    return %c0_i32, %c0_i32_0 : i32, i32
  }
  func.func @transform_4(%arg0: i32) -> (i32, i32, i32) {
    %c0_i32 = arith.constant 0 : i32
    %c0_i32_0 = arith.constant 0 : i32
    %c0_i32_1 = arith.constant 0 : i32
    return %c0_i32, %arg0, %c0_i32_0 : i32, i32, i32
  }
}

</mosaic_0001>

<llo_original>
// kernel: tpu_custom_call.1
$region0: #{tpu_custom_call.1}
  #allocation0 [shape = 'u32[]', space=smem, size = 0x4, offset = 0x4, fixed_abs, tag = 'smem constant byte address 0x4 - core index']
  #allocation1 [shape = 'u32[144,128]{1,0:T(1,128)}', space=vmem, size = 0x12000, scoped, tag = 'internal scratch']
  #allocation2 [shape = 'f32[96,384]{1,0:T(8,128)}', space=vmem, size = 0x24000, scoped, tag = 'scratch operand']
  #allocation3 [shape = 'f32[16,128]{1,0:T(8,128)}', space=vmem, size = 0x2000, scoped, tag = 'scratch operand']
  %s0 = inlined_call_operand.vmem [shape: f32[12,8,8], index: 0, kind: input, shape index: {}]
  %s1 = inlined_call_operand.hbm [shape: bf16[128,384], index: 1, kind: input, shape index: {}]
  %s2 = inlined_call_operand.hbm [shape: f32[10,384], index: 2, kind: input, shape index: {}]
  %s3 = inlined_call_operand.vmem [shape: f32[136,128], index: 3, kind: input, shape index: {}]
  %s4 = inlined_call_operand.hbm [shape: f32[2,8,128], index: 4, kind: output, shape index: {}]
  %s5 = sld [smem:[#allocation0]]
  $region34: #{tpu_custom_call.1} parent=0
    _
  %s7 = ssub.s32 1, %s5
  %s8 = scalar_select 0, %s7, %s5
  $region1: #{tpu_custom_call.1} parent=0
    #allocation4 [shape = 'u8[98304]{0}', space=vmem, size = 0x18000, scoped, tag = 'input window, operand 1, single buffered']
    #allocation5 [shape = 's32[1]{0}', space=sflag, size = 0x4, scoped, tag = 'scoped memory for tpu_custom_call.1']
    #allocation6 [shape = 's32[1]{0}', space=sflag, size = 0x4, scoped, tag = 'scoped memory for tpu_custom_call.1']
    #allocation7 [shape = 'u8[24576]{0}', space=vmem, size = 0x6000, scoped, tag = 'input window, operand 2, single buffered']
    #allocation8 [shape = 's32[1]{0}', space=sflag, size = 0x4, scoped, tag = 'scoped memory for tpu_custom_call.1']
    #allocation9 [shape = 'u8[8192]{0}', space=vmem, size = 0x2000, scoped, tag = 'output window, operand 0, single buffered']
    %9 = vsyncpa [#allocation5], 0
    %10 = vsyncpa [#allocation8], 0
    %11 = vsyncpa [#allocation6], 0
    // Predicated region
    $region2: #{tpu_custom_call.1} parent=1 // pred_check
      _
    $region3: #{tpu_custom_call.1} parent=1 // pred_check_branch
      %13 = sbr.rel (0) target = $region5
    $region4: #{tpu_custom_call.1} parent=1 // pred_region
      _
    $region5: #{tpu_custom_call.1} parent=1 // pred_fallthru
      _
    // Predicated region
    $region6: #{tpu_custom_call.1} parent=1 // pred_check
      _
    $region7: #{tpu_custom_call.1} parent=1 // pred_check_branch
      %15 = sbr.rel (0) target = $region9
    $region8: #{tpu_custom_call.1} parent=1 // pred_region
      %s17 = ssub.s32 3072, 3072
      %18 = vsyncadd [#allocation5], %s17
      %s19 = sshll.u32 [#allocation4], 4
      %s20 = int_to_ptr.vmem [resolvable:$true] %s19
      %25 = dma.hbm_to_vmem [thread:$0]  %s1, 3072, %s20, [#allocation5], 192, 192, 12
    $region9: #{tpu_custom_call.1} parent=1 // pred_fallthru
      _
    // Predicated region
    $region10: #{tpu_custom_call.1} parent=1 // pred_check
      _
    $region11: #{tpu_custom_call.1} parent=1 // pred_check_branch
      %27 = sbr.rel (0) target = $region13
    $region12: #{tpu_custom_call.1} parent=1 // pred_region
      %s29 = ssub.s32 768, 768
      %30 = vsyncadd [#allocation8], %s29
      %s31 = sshll.u32 [#allocation7], 4
      %s32 = int_to_ptr.vmem [resolvable:$true] %s31
      %37 = dma.hbm_to_vmem [thread:$0]  %s2, 768, %s32, [#allocation8], 384, 384, 24
    $region13: #{tpu_custom_call.1} parent=1 // pred_fallthru
      _
    // Predicated region
    $region14: #{tpu_custom_call.1} parent=1 // pred_check
      _
    $region15: #{tpu_custom_call.1} parent=1 // pred_check_branch
      %39 = sbr.rel (0) target = $region17
    $region16: #{tpu_custom_call.1} parent=1 // pred_region
      _
    $region17: #{tpu_custom_call.1} parent=1 // pred_fallthru
      _
    // Predicated region
    $region18: #{tpu_custom_call.1} parent=1 // pred_check
      _
    $region19: #{tpu_custom_call.1} parent=1 // pred_check_branch
      %41 = sbr.rel (0) target = $region21
    $region20: #{tpu_custom_call.1} parent=1 // pred_region
      %42 = dma.done [#allocation5], 3072
    $region21: #{tpu_custom_call.1} parent=1 // pred_fallthru
      _
    // Predicated region
    $region22: #{tpu_custom_call.1} parent=1 // pred_check
      _
    $region23: #{tpu_custom_call.1} parent=1 // pred_check_branch
      %44 = sbr.rel (0) target = $region25
    $region24: #{tpu_custom_call.1} parent=1 // pred_region
      %45 = dma.done [#allocation8], 768
    $region25: #{tpu_custom_call.1} parent=1 // pred_fallthru
      _
    %47 = vst [vmem:[#allocation3] sm:$0xff] 0.0
    %48 = vst [vmem:[#allocation3 + $0x8] sm:$0xff] 0.0
    %v49 = vld [vmem:[%s0] sm:$0xff]
    %v50 = vld [vmem:[%s0 + $0x8] sm:$0xff]
    %v51 = vld [vmem:[%s0 + $0x10] sm:$0xff]
    %v52 = vld [vmem:[%s0 + $0x18] sm:$0xff]
    %v53 = vld [vmem:[%s0 + $0x20] sm:$0xff]
    %v54 = vld [vmem:[%s0 + $0x28] sm:$0xff]
    %v55 = vld [vmem:[%s0 + $0x30] sm:$0xff]
    %v56 = vld [vmem:[%s0 + $0x38] sm:$0xff]
    %v57 = vld [vmem:[%s0 + $0x40] sm:$0xff]
    %v58 = vld [vmem:[%s0 + $0x48] sm:$0xff]
    %v59 = vld [vmem:[%s0 + $0x50] sm:$0xff]
    %v60 = vld [vmem:[%s0 + $0x58] sm:$0xff]
    %v61 = vld [vmem:[#allocation7] sm:$0xff]
    %v62 = vld [vmem:[#allocation7 + $0x8] sm:$0xff]
    %v63 = vld [vmem:[#allocation7 + $0x10] sm:$0xff]
    %s64 = scalar_lea.vmem [#allocation7], 24
    %v65 = vld [vmem:[%s64] ss:$8 sm:$0x7]
    %v67 = vlaneseq
    %v68 = vshrl.u32 %v67, 7
    %v69 = vsub.s32 0, %v68
    %v70 = vrot.slane %v65, %v69
    %v71 = vlaneseq
    %v72 = vshrl.u32 %v71, 7
    %v73 = vsub.s32 1, %v72
    %v74 = vrot.slane %v65, %v73
    %v75 = vlaneseq
    %v76 = vshrl.u32 %v75, 7
    %v77 = vsub.s32 2, %v76
    %v78 = vrot.slane %v65, %v77
    %vm82 = vcmask 64512
    %v84 = vsel %vm82, %v49, 0
    %v87 = vsel %vm82, %v50, 0
    %v90 = vsel %vm82, %v51, 0
    %v93 = vsel %vm82, %v52, 0
    %v96 = vsel %vm82, %v53, 0
    %v99 = vsel %vm82, %v54, 0
    %v102 = vsel %vm82, %v55, 0
    %v105 = vsel %vm82, %v56, 0
    %v108 = vsel %vm82, %v57, 0
    %v111 = vsel %vm82, %v58, 0
    %v114 = vsel %vm82, %v59, 0
    %v117 = vsel %vm82, %v60, 0
    %119 = vmatprep.subr.mxu0 %v62
    %120 = vmatpush1.msra.mxu0 %v61
    %121 = vmatprep.subr.mxu0 0.0
    %122 = vmatpush1.msra.mxu0 0.0
    %123 = vmatprep.subr.mxu0 0.0
    %124 = vmatpush1.msra.mxu0 0.0
    %125 = vmatprep.subr.mxu0 0.0
    %126 = vmatpush1.msra.mxu0 0.0
    %127 = vmatprep.subr.mxu0 0.0
    %128 = vmatpush1.msra.mxu0 0.0
    %129 = vmatprep.subr.mxu0 0.0
    %130 = vmatpush1.msra.mxu0 0.0
    %131 = vmatprep.subr.mxu0 0.0
    %132 = vmatpush1.msra.mxu0 0.0
    %133 = vmatprep.subr.mxu0 0.0
    %134 = vmatpush1.msra.mxu0 0.0
    %135 = vmatprep.subr.mxu0 0.0
    %136 = vmatpush1.msra.mxu0 0.0
    %137 = vmatprep.subr.mxu0 0.0
    %138 = vmatpush1.msra.mxu0 0.0
    %139 = vmatprep.subr.mxu0 0.0
    %140 = vmatpush1.msra.mxu0 0.0
    %141 = vmatprep.subr.mxu0 0.0
    %142 = vmatpush1.msra.mxu0 0.0
    %143 = vmatprep.subr.mxu0 0.0
    %144 = vmatpush1.msra.mxu0 0.0
    %145 = vmatprep.subr.mxu0 0.0
    %146 = vmatpush1.msra.mxu0 0.0
    %147 = vmatprep.subr.mxu0 0.0
    %148 = vmatpush1.msra.mxu0 0.0
    %149 = vmatprep.subr.mxu0 0.0
    %150 = vmatpush1.msra.mxu0 0.0
    %151 = vmatprep.subr.mxu0 0.0
    %152 = vmatpush1.msra.mxu0 0.0
    %153 = vmatprep.subr.mxu0 0.0
    %154 = vmatpush1.msra.mxu0 0.0
    %155 = vmatprep.subr.mxu0 0.0
    %156 = vmatpush1.msra.mxu0 0.0
    %157 = vmatprep.subr.mxu0 0.0
    %158 = vmatpush1.msra.mxu0 0.0
    %159 = vmatprep.subr.mxu0 0.0
    %160 = vmatpush1.msra.mxu0 0.0
    %161 = vmatprep.subr.mxu0 0.0
    %162 = vmatpush1.msra.mxu0 0.0
    %163 = vmatprep.subr.mxu0 0.0
    %164 = vmatpush1.msra.mxu0 0.0
    %165 = vmatprep.subr.mxu0 0.0
    %166 = vmatpush1.msra.mxu0 0.0
    %167 = vmatprep.subr.mxu0 0.0
    %168 = vmatpush1.msra.mxu0 0.0
    %169 = vmatprep.subr.mxu0 0.0
    %170 = vmatpush1.msra.mxu0 0.0
    %171 = vmatprep.subr.mxu0 0.0
    %172 = vmatpush1.msra.mxu0 0.0
    %173 = vmatprep.subr.mxu0 0.0
    %174 = vmatpush1.msra.mxu0 0.0
    %175 = vmatprep.subr.mxu0 0.0
    %176 = vmatpush1.msra.mxu0 0.0
    %177 = vmatprep.subr.mxu0 0.0
    %178 = vmatpush1.msra.mxu0 0.0
    %179 = vmatprep.subr.mxu0 0.0
    %180 = vmatpush1.msra.mxu0 0.0
    %181 = vmatprep.subr.mxu0 0.0
    %182 = vmatpush1.msra.mxu0 0.0
    %183 = vmatprep.mubr.f32.mxu0 0.0
    %184 = vmatmul.mubr.f32.gmra.mrb[0].mxu0 %v84
    %v185 = vpop.f32.mrb[0].mxu0
    %v186 = vadd.f32 %v70, %v185
    %v187 = vpop.f32.mrb[0].mxu0
    %v188 = vadd.f32 %v74, %v187
    %189 = vmatprep.mubr.f32.mxu0 0.0
    %190 = vmatmul.mubr.f32.gmra.mrb[0].mxu0 %v87
    %v191 = vpop.f32.mrb[0].mxu0
    %v192 = vadd.f32 %v70, %v191
    %v193 = vpop.f32.mrb[0].mxu0
    %v194 = vadd.f32 %v74, %v193
    %195 = vmatprep.mubr.f32.mxu0 0.0
    %196 = vmatmul.mubr.f32.gmra.mrb[0].mxu0 %v90
    %v197 = vpop.f32.mrb[0].mxu0
    %v198 = vadd.f32 %v70, %v197
    %v199 = vpop.f32.mrb[0].mxu0
    %v200 = vadd.f32 %v74, %v199
    %201 = vmatprep.mubr.f32.mxu0 0.0
    %202 = vmatmul.mubr.f32.gmra.mrb[0].mxu0 %v93
    %v203 = vpop.f32.mrb[0].mxu0
    %v204 = vadd.f32 %v70, %v203
    %v205 = vpop.f32.mrb[0].mxu0
    %v206 = vadd.f32 %v74, %v205
    %207 = vmatprep.mubr.f32.mxu0 0.0
    %208 = vmatmul.mubr.f32.gmra.mrb[0].mxu0 %v96
    %v209 = vpop.f32.mrb[0].mxu0
    %v210 = vadd.f32 %v70, %v209
    %v211 = vpop.f32.mrb[0].mxu0
    %v212 = vadd.f32 %v74, %v211
    %213 = vmatprep.mubr.f32.mxu0 0.0
    %214 = vmatmul.mubr.f32.gmra.mrb[0].mxu0 %v99
    %v215 = vpop.f32.mrb[0].mxu0
    %v216 = vadd.f32 %v70, %v215
    %v217 = vpop.f32.mrb[0].mxu0
    %v218 = vadd.f32 %v74, %v217
    %219 = vmatprep.mubr.f32.mxu0 0.0
    %220 = vmatmul.mubr.f32.gmra.mrb[0].mxu0 %v102
    %v221 = vpop.f32.mrb[0].mxu0
    %v222 = vadd.f32 %v70, %v221
    %v223 = vpop.f32.mrb[0].mxu0
    %v224 = vadd.f32 %v74, %v223
    %225 = vmatprep.mubr.f32.mxu0 0.0
    %226 = vmatmul.mubr.f32.gmra.mrb[0].mxu0 %v105
    %v227 = vpop.f32.mrb[0].mxu0
    %v228 = vadd.f32 %v70, %v227
    %v229 = vpop.f32.mrb[0].mxu0
    %v230 = vadd.f32 %v74, %v229
    %231 = vmatprep.mubr.f32.mxu0 0.0
    %232 = vmatmul.mubr.f32.gmra.mrb[0].mxu0 %v108
    %v233 = vpop.f32.mrb[0].mxu0
    %v234 = vadd.f32 %v70, %v233
    %v235 = vpop.f32.mrb[0].mxu0
    %v236 = vadd.f32 %v74, %v235
    %237 = vmatprep.mubr.f32.mxu0 0.0
    %238 = vmatmul.mubr.f32.gmra.mrb[0].mxu0 %v111
    %v239 = vpop.f32.mrb[0].mxu0
    %v240 = vadd.f32 %v70, %v239
    %v241 = vpop.f32.mrb[0].mxu0
    %v242 = vadd.f32 %v74, %v241
    %243 = vmatprep.mubr.f32.mxu0 0.0
    %244 = vmatmul.mubr.f32.gmra.mrb[0].mxu0 %v114
    %v245 = vpop.f32.mrb[0].mxu0
    %v246 = vadd.f32 %v70, %v245
    %v247 = vpop.f32.mrb[0].mxu0
    %v248 = vadd.f32 %v74, %v247
    %249 = vmatprep.mubr.f32.mxu0 0.0
    %250 = vmatmul.mubr.f32.gmra.mrb[0].mxu0 %v117
    %v251 = vpop.f32.mrb[0].mxu0
    %v252 = vadd.f32 %v70, %v251
    %v253 = vpop.f32.mrb[0].mxu0
    %v254 = vadd.f32 %v74, %v253
    %255 = vdwg.mxu0
    %256 = vmatprep.subr.mxu0 0.0
    %257 = vmatpush1.msra.mxu0 %v63
    %258 = vmatprep.subr.mxu0 0.0
    %259 = vmatpush1.msra.mxu0 0.0
    %260 = vmatprep.subr.mxu0 0.0
    %261 = vmatpush1.msra.mxu0 0.0
    %262 = vmatprep.subr.mxu0 0.0
    %263 = vmatpush1.msra.mxu0 0.0
    %264 = vmatprep.subr.mxu0 0.0
    %265 = vmatpush1.msra.mxu0 0.0
    %266 = vmatprep.subr.mxu0 0.0
    %267 = vmatpush1.msra.mxu0 0.0
    %268 = vmatprep.subr.mxu0 0.0
    %269 = vmatpush1.msra.mxu0 0.0
    %270 = vmatprep.subr.mxu0 0.0
    %271 = vmatpush1.msra.mxu0 0.0
    %272 = vmatprep.subr.mxu0 0.0
    %273 = vmatpush1.msra.mxu0 0.0
    %274 = vmatprep.subr.mxu0 0.0
    %275 = vmatpush1.msra.mxu0 0.0
    %276 = vmatprep.subr.mxu0 0.0
    %277 = vmatpush1.msra.mxu0 0.0
    %278 = vmatprep.subr.mxu0 0.0
    %279 = vmatpush1.msra.mxu0 0.0
    %280 = vmatprep.subr.mxu0 0.0
    %281 = vmatpush1.msra.mxu0 0.0
    %282 = vmatprep.subr.mxu0 0.0
    %283 = vmatpush1.msra.mxu0 0.0
    %284 = vmatprep.subr.mxu0 0.0
    %285 = vmatpush1.msra.mxu0 0.0
    %286 = vmatprep.subr.mxu0 0.0
    %287 = vmatpush1.msra.mxu0 0.0
    %288 = vmatprep.subr.mxu0 0.0
    %289 = vmatpush1.msra.mxu0 0.0
    %290 = vmatprep.subr.mxu0 0.0
    %291 = vmatpush1.msra.mxu0 0.0
    %292 = vmatprep.subr.mxu0 0.0
    %293 = vmatpush1.msra.mxu0 0.0
    %294 = vmatprep.subr.mxu0 0.0
    %295 = vmatpush1.msra.mxu0 0.0
    %296 = vmatprep.subr.mxu0 0.0
    %297 = vmatpush1.msra.mxu0 0.0
    %298 = vmatprep.subr.mxu0 0.0
    %299 = vmatpush1.msra.mxu0 0.0
    %300 = vmatprep.subr.mxu0 0.0
    %301 = vmatpush1.msra.mxu0 0.0
    %302 = vmatprep.subr.mxu0 0.0
    %303 = vmatpush1.msra.mxu0 0.0
    %304 = vmatprep.subr.mxu0 0.0
    %305 = vmatpush1.msra.mxu0 0.0
    %306 = vmatprep.subr.mxu0 0.0
    %307 = vmatpush1.msra.mxu0 0.0
    %308 = vmatprep.subr.mxu0 0.0
    %309 = vmatpush1.msra.mxu0 0.0
    %310 = vmatprep.subr.mxu0 0.0
    %311 = vmatpush1.msra.mxu0 0.0
    %312 = vmatprep.subr.mxu0 0.0
    %313 = vmatpush1.msra.mxu0 0.0
    %314 = vmatprep.subr.mxu0 0.0
    %315 = vmatpush1.msra.mxu0 0.0
    %316 = vmatprep.subr.mxu0 0.0
    %317 = vmatpush1.msra.mxu0 0.0
    %318 = vmatprep.subr.mxu0 0.0
    %319 = vmatpush1.msra.mxu0 0.0
    %320 = vmatprep.mubr.f32.mxu0 0.0
    %321 = vmatmul.mubr.f32.gmra.mrb[0].mxu0 %v84
    %v322 = vpop.f32.mrb[0].mxu0
    %v323 = vadd.f32 %v78, %v322
    %v324 = vpop.f32.mrb[0].mxu0
    %325 = vmatprep.mubr.f32.mxu0 0.0
    %326 = vmatmul.mubr.f32.gmra.mrb[0].mxu0 %v87
    %v327 = vpop.f32.mrb[0].mxu0
    %v328 = vadd.f32 %v78, %v327
    %v329 = vpop.f32.mrb[0].mxu0
    %330 = vmatprep.mubr.f32.mxu0 0.0
    %331 = vmatmul.mubr.f32.gmra.mrb[0].mxu0 %v90
    %v332 = vpop.f32.mrb[0].mxu0
    %v333 = vadd.f32 %v78, %v332
    %v334 = vpop.f32.mrb[0].mxu0
    %335 = vmatprep.mubr.f32.mxu0 0.0
    %336 = vmatmul.mubr.f32.gmra.mrb[0].mxu0 %v93
    %v337 = vpop.f32.mrb[0].mxu0
    %v338 = vadd.f32 %v78, %v337
    %v339 = vpop.f32.mrb[0].mxu0
    %340 = vmatprep.mubr.f32.mxu0 0.0
    %341 = vmatmul.mubr.f32.gmra.mrb[0].mxu0 %v96
    %v342 = vpop.f32.mrb[0].mxu0
    %v343 = vadd.f32 %v78, %v342
    %v344 = vpop.f32.mrb[0].mxu0
    %345 = vmatprep.mubr.f32.mxu0 0.0
    %346 = vmatmul.mubr.f32.gmra.mrb[0].mxu0 %v99
    %v347 = vpop.f32.mrb[0].mxu0
    %v348 = vadd.f32 %v78, %v347
    %v349 = vpop.f32.mrb[0].mxu0
    %350 = vmatprep.mubr.f32.mxu0 0.0
    %351 = vmatmul.mubr.f32.gmra.mrb[0].mxu0 %v102
    %v352 = vpop.f32.mrb[0].mxu0
    %v353 = vadd.f32 %v78, %v352
    %v354 = vpop.f32.mrb[0].mxu0
    %355 = vmatprep.mubr.f32.mxu0 0.0
    %356 = vmatmul.mubr.f32.gmra.mrb[0].mxu0 %v105
    %v357 = vpop.f32.mrb[0].mxu0
    %v358 = vadd.f32 %v78, %v357
    %v359 = vpop.f32.mrb[0].mxu0
    %360 = vmatprep.mubr.f32.mxu0 0.0
    %361 = vmatmul.mubr.f32.gmra.mrb[0].mxu0 %v108
    %v362 = vpop.f32.mrb[0].mxu0
    %v363 = vadd.f32 %v78, %v362
    %v364 = vpop.f32.mrb[0].mxu0
    %365 = vmatprep.mubr.f32.mxu0 0.0
    %366 = vmatmul.mubr.f32.gmra.mrb[0].mxu0 %v111
    %v367 = vpop.f32.mrb[0].mxu0
    %v368 = vadd.f32 %v78, %v367
    %v369 = vpop.f32.mrb[0].mxu0
    %370 = vmatprep.mubr.f32.mxu0 0.0
    %371 = vmatmul.mubr.f32.gmra.mrb[0].mxu0 %v114
    %v372 = vpop.f32.mrb[0].mxu0
    %v373 = vadd.f32 %v78, %v372
    %v374 = vpop.f32.mrb[0].mxu0
    %375 = vmatprep.mubr.f32.mxu0 0.0
    %376 = vmatmul.mubr.f32.gmra.mrb[0].mxu0 %v117
    %v377 = vpop.f32.mrb[0].mxu0
    %v378 = vadd.f32 %v78, %v377
    %v379 = vpop.f32.mrb[0].mxu0
    %380 = vdwg.mxu0
    %381 = vst [vmem:[#allocation2] sm:$0xff] %v186
    %382 = vst [vmem:[#allocation2 + $0x8] sm:$0xff] %v188
    %383 = vst [vmem:[#allocation2 + $0x10] sm:$0xff] %v323
    %384 = vst [vmem:[#allocation2 + $0x18] sm:$0xff] %v192
    %385 = vst [vmem:[#allocation2 + $0x20] sm:$0xff] %v194
    %386 = vst [vmem:[#allocation2 + $0x28] sm:$0xff] %v328
    %387 = vst [vmem:[#allocation2 + $0x30] sm:$0xff] %v198
    %388 = vst [vmem:[#allocation2 + $0x38] sm:$0xff] %v200
    %389 = vst [vmem:[#allocation2 + $0x40] sm:$0xff] %v333
    %390 = vst [vmem:[#allocation2 + $0x48] sm:$0xff] %v204
    %391 = vst [vmem:[#allocation2 + $0x50] sm:$0xff] %v206
    %392 = vst [vmem:[#allocation2 + $0x58] sm:$0xff] %v338
    %393 = vst [vmem:[#allocation2 + $0x60] sm:$0xff] %v210
    %394 = vst [vmem:[#allocation2 + $0x68] sm:$0xff] %v212
    %395 = vst [vmem:[#allocation2 + $0x70] sm:$0xff] %v343
    %396 = vst [vmem:[#allocation2 + $0x78] sm:$0xff] %v216
    %397 = vst [vmem:[#allocation2 + $0x80] sm:$0xff] %v218
    %398 = vst [vmem:[#allocation2 + $0x88] sm:$0xff] %v348
    %399 = vst [vmem:[#allocation2 + $0x90] sm:$0xff] %v222
    %400 = vst [vmem:[#allocation2 + $0x98] sm:$0xff] %v224
    %401 = vst [vmem:[#allocation2 + $0xa0] sm:$0xff] %v353
    %402 = vst [vmem:[#allocation2 + $0xa8] sm:$0xff] %v228
    %403 = vst [vmem:[#allocation2 + $0xb0] sm:$0xff] %v230
    %404 = vst [vmem:[#allocation2 + $0xb8] sm:$0xff] %v358
    %405 = vst [vmem:[#allocation2 + $0xc0] sm:$0xff] %v234
    %406 = vst [vmem:[#allocation2 + $0xc8] sm:$0xff] %v236
    %407 = vst [vmem:[#allocation2 + $0xd0] sm:$0xff] %v363
    %408 = vst [vmem:[#allocation2 + $0xd8] sm:$0xff] %v240
    %409 = vst [vmem:[#allocation2 + $0xe0] sm:$0xff] %v242
    %410 = vst [vmem:[#allocation2 + $0xe8] sm:$0xff] %v368
    %411 = vst [vmem:[#allocation2 + $0xf0] sm:$0xff] %v246
    %412 = vst [vmem:[#allocation2 + $0xf8] sm:$0xff] %v248
    %413 = vst [vmem:[#allocation2 + $0x100] sm:$0xff] %v373
    %414 = vst [vmem:[#allocation2 + $0x108] sm:$0xff] %v252
    %415 = vst [vmem:[#allocation2 + $0x110] sm:$0xff] %v254
    %416 = vst [vmem:[#allocation2 + $0x118] sm:$0xff] %v378
    %v417 = vld [vmem:[#allocation4] sm:$0xff]
    %v418 = vld [vmem:[#allocation4 + $0x8] sm:$0xf]
    %v419 = vld [vmem:[#allocation4 + $0xc] sm:$0xff]
    %v420 = vld [vmem:[#allocation4 + $0x14] sm:$0xf]
    %v421 = vld [vmem:[#allocation4 + $0x18] sm:$0xff]
    %v422 = vld [vmem:[#allocation4 + $0x20] sm:$0xf]
    %v423 = vld [vmem:[#allocation4 + $0x24] sm:$0xff]
    %v424 = vld [vmem:[#allocation4 + $0x2c] sm:$0xf]
    %v425 = vld [vmem:[#allocation4 + $0x30] sm:$0xff]
    %v426 = vld [vmem:[#allocation4 + $0x38] sm:$0xf]
    %v427 = vld [vmem:[#allocation4 + $0x3c] sm:$0xff]
    %v428 = vld [vmem:[#allocation4 + $0x44] sm:$0xf]
    %v429 = vld [vmem:[#allocation4 + $0x48] sm:$0xff]
    %v430 = vld [vmem:[#allocation4 + $0x50] sm:$0xf]
    %v431 = vld [vmem:[#allocation4 + $0x54] sm:$0xff]
    %v432 = vld [vmem:[#allocation4 + $0x5c] sm:$0xf]
    %v433 = vld [vmem:[#allocation4 + $0x60] sm:$0xff]
    %v434 = vld [vmem:[#allocation4 + $0x68] sm:$0xf]
    %v435 = vld [vmem:[#allocation4 + $0x6c] sm:$0xff]
    %v436 = vld [vmem:[#allocation4 + $0x74] sm:$0xf]
    %v437 = vld [vmem:[#allocation4 + $0x78] sm:$0xff]
    %v438 = vld [vmem:[#allocation4 + $0x80] sm:$0xf]
    %v439 = vld [vmem:[#allocation4 + $0x84] sm:$0xff]
    %v440 = vld [vmem:[#allocation4 + $0x8c] sm:$0xf]
    %v441 = vld [vmem:[#allocation4 + $0x90] sm:$0xff]
    %v442 = vld [vmem:[#allocation4 + $0x98] sm:$0xf]
    %v443 = vld [vmem:[#allocation4 + $0x9c] sm:$0xff]
    %v444 = vld [vmem:[#allocation4 + $0xa4] sm:$0xf]
    %v445 = vld [vmem:[#allocation4 + $0xa8] sm:$0xff]
    %v446 = vld [vmem:[#allocation4 + $0xb0] sm:$0xf]
    %v447 = vld [vmem:[#allocation4 + $0xb4] sm:$0xff]
    %v448 = vld [vmem:[#allocation4 + $0xbc] sm:$0xf]
    %v449 = vld [vmem:[#allocation7 + $0x29] ss:$0 sm:$0xff]
    %v450 = vld [vmem:[#allocation2] sm:$0xff]
    %v451 = vld [vmem:[#allocation2 + $0x8] sm:$0xff]
    %v452 = vld [vmem:[#allocation2 + $0x10] sm:$0xff]
    %v485 = vunpack.c.l.b16 %v417
    %v486 = vunpack.c.h.b16 %v417
    %v487 = vunpack.c.l.b16 %v418
    %v488 = vunpack.c.l.b16 %v419
    %v489 = vunpack.c.h.b16 %v419
    %v490 = vunpack.c.l.b16 %v420
    %v491 = vunpack.c.l.b16 %v421
    %v492 = vunpack.c.h.b16 %v421
    %v493 = vunpack.c.l.b16 %v422
    %v494 = vunpack.c.l.b16 %v423
    %v495 = vunpack.c.h.b16 %v423
    %v496 = vunpack.c.l.b16 %v424
    %v497 = vunpack.c.l.b16 %v425
    %v498 = vunpack.c.h.b16 %v425
    %v499 = vunpack.c.l.b16 %v426
    %v500 = vunpack.c.l.b16 %v427
    %v501 = vunpack.c.h.b16 %v427
    %v502 = vunpack.c.l.b16 %v428
    %v503 = vunpack.c.l.b16 %v429
    %v504 = vunpack.c.h.b16 %v429
    %v505 = vunpack.c.l.b16 %v430
    %v506 = vunpack.c.l.b16 %v431
    %v507 = vunpack.c.h.b16 %v431
    %v508 = vunpack.c.l.b16 %v432
    %v509 = vunpack.c.l.b16 %v433
    %v510 = vunpack.c.h.b16 %v433
    %v511 = vunpack.c.l.b16 %v434
    %v512 = vunpack.c.l.b16 %v435
    %v513 = vunpack.c.h.b16 %v435
    %v514 = vunpack.c.l.b16 %v436
    %v515 = vunpack.c.l.b16 %v437
    %v516 = vunpack.c.h.b16 %v437
    %v517 = vunpack.c.l.b16 %v438
    %v518 = vunpack.c.l.b16 %v439
    %v519 = vunpack.c.h.b16 %v439
    %v520 = vunpack.c.l.b16 %v440
    %v521 = vunpack.c.l.b16 %v441
    %v522 = vunpack.c.h.b16 %v441
    %v523 = vunpack.c.l.b16 %v442
    %v524 = vunpack.c.l.b16 %v443
    %v525 = vunpack.c.h.b16 %v443
    %v526 = vunpack.c.l.b16 %v444
    %v527 = vunpack.c.l.b16 %v445
    %v528 = vunpack.c.h.b16 %v445
    %v529 = vunpack.c.l.b16 %v446
    %v530 = vunpack.c.l.b16 %v447
    %v531 = vunpack.c.h.b16 %v447
    %v532 = vunpack.c.l.b16 %v448
    %v533 = vpack.c.b16 %v488, %v485
    %v534 = vpack.c.b16 %v489, %v486
    %v535 = vpack.c.b16 %v490, %v487
    %v536 = vpack.c.b16 %v494, %v491
    %v537 = vpack.c.b16 %v495, %v492
    %v538 = vpack.c.b16 %v496, %v493
    %v539 = vpack.c.b16 %v500, %v497
    %v540 = vpack.c.b16 %v501, %v498
    %v541 = vpack.c.b16 %v502, %v499
    %v542 = vpack.c.b16 %v506, %v503
    %v543 = vpack.c.b16 %v507, %v504
    %v544 = vpack.c.b16 %v508, %v505
    %v545 = vpack.c.b16 %v512, %v509
    %v546 = vpack.c.b16 %v513, %v510
    %v547 = vpack.c.b16 %v514, %v511
    %v548 = vpack.c.b16 %v518, %v515
    %v549 = vpack.c.b16 %v519, %v516
    %v550 = vpack.c.b16 %v520, %v517
    %v551 = vpack.c.b16 %v524, %v521
    %v552 = vpack.c.b16 %v525, %v522
    %v553 = vpack.c.b16 %v526, %v523
    %v554 = vpack.c.b16 %v530, %v527
    %v555 = vpack.c.b16 %v531, %v528
    %v556 = vpack.c.b16 %v532, %v529
    %581 = vmatprep.subr.bf16.mxu0 %v534
    %582 = vmatpush1.bf16.msra.mxu0 %v533
    %583 = vmatprep.subr.bf16.mxu0 %v537
    %584 = vmatpush1.bf16.msra.mxu0 %v536
    %585 = vmatprep.subr.bf16.mxu0 %v540
    %586 = vmatpush1.bf16.msra.mxu0 %v539
    %587 = vmatprep.subr.bf16.mxu0 %v543
    %588 = vmatpush1.bf16.msra.mxu0 %v542
    %589 = vmatprep.subr.bf16.mxu0 %v546
    %590 = vmatpush1.bf16.msra.mxu0 %v545
    %591 = vmatprep.subr.bf16.mxu0 %v549
    %592 = vmatpush1.bf16.msra.mxu0 %v548
    %593 = vmatprep.subr.bf16.mxu0 %v552
    %594 = vmatpush1.bf16.msra.mxu0 %v551
    %595 = vmatprep.subr.bf16.mxu0 %v555
    %596 = vmatpush1.bf16.msra.mxu0 %v554
    %597 = vmatprep.subr.bf16.mxu0 0
    %598 = vmatpush1.bf16.msra.mxu0 0
    %599 = vmatprep.subr.bf16.mxu0 0
    %600 = vmatpush1.bf16.msra.mxu0 0
    %601 = vmatprep.subr.bf16.mxu0 0
    %602 = vmatpush1.bf16.msra.mxu0 0
    %603 = vmatprep.subr.bf16.mxu0 0
    %604 = vmatpush1.bf16.msra.mxu0 0
    %605 = vmatprep.subr.bf16.mxu0 0
    %606 = vmatpush1.bf16.msra.mxu0 0
    %607 = vmatprep.subr.bf16.mxu0 0
    %608 = vmatpush1.bf16.msra.mxu0 0
    %609 = vmatprep.subr.bf16.mxu0 0
    %610 = vmatpush1.bf16.msra.mxu0 0
    %611 = vmatprep.subr.bf16.mxu0 0
    %612 = vmatpush1.bf16.msra.mxu0 0
    %613 = vmatprep.mubr.bf16.mxu0 0
    %614 = vmatmul.mubr.bf16.gmra.mrb[0].mxu0 0
    %v615 = vpop.f32.mrb[0].mxu0
    %v616 = vadd.f32 0.0, %v615
    %v617 = vpop.f32.mrb[0].mxu0
    %v618 = vadd.f32 0.0, %v617
    %v619 = vpop.f32.mrb[0].mxu0
    %v620 = vpop.f32.mrb[0].mxu0
    %621 = vdwg.mxu0
    %622 = vmatprep.subr.bf16.mxu0 0
    %623 = vmatpush1.bf16.msra.mxu0 %v535
    %624 = vmatprep.subr.bf16.mxu0 0
    %625 = vmatpush1.bf16.msra.mxu0 %v538
    %626 = vmatprep.subr.bf16.mxu0 0
    %627 = vmatpush1.bf16.msra.mxu0 %v541
    %628 = vmatprep.subr.bf16.mxu0 0
    %629 = vmatpush1.bf16.msra.mxu0 %v544
    %630 = vmatprep.subr.bf16.mxu0 0
    %631 = vmatpush1.bf16.msra.mxu0 %v547
    %632 = vmatprep.subr.bf16.mxu0 0
    %633 = vmatpush1.bf16.msra.mxu0 %v550
    %634 = vmatprep.subr.bf16.mxu0 0
    %635 = vmatpush1.bf16.msra.mxu0 %v553
    %636 = vmatprep.subr.bf16.mxu0 0
    %637 = vmatpush1.bf16.msra.mxu0 %v556
    %638 = vmatprep.subr.bf16.mxu0 0
    %639 = vmatpush1.bf16.msra.mxu0 0
    %640 = vmatprep.subr.bf16.mxu0 0
    %641 = vmatpush1.bf16.msra.mxu0 0
    %642 = vmatprep.subr.bf16.mxu0 0
    %643 = vmatpush1.bf16.msra.mxu0 0
    %644 = vmatprep.subr.bf16.mxu0 0
    %645 = vmatpush1.bf16.msra.mxu0 0
    %646 = vmatprep.subr.bf16.mxu0 0
    %647 = vmatpush1.bf16.msra.mxu0 0
    %648 = vmatprep.subr.bf16.mxu0 0
    %649 = vmatpush1.bf16.msra.mxu0 0
    %650 = vmatprep.subr.bf16.mxu0 0
    %651 = vmatpush1.bf16.msra.mxu0 0
    %652 = vmatprep.subr.bf16.mxu0 0
    %653 = vmatpush1.bf16.msra.mxu0 0
    %654 = vmatprep.mubr.bf16.mxu0 0
    %655 = vmatmul.mubr.bf16.gmra.mrb[0].mxu0 0
    %v656 = vpop.f32.mrb[0].mxu0
    %v657 = vadd.f32 0.0, %v656
    %v658 = vpop.f32.mrb[0].mxu0
    %v659 = vpop.f32.mrb[0].mxu0
    %v660 = vpop.f32.mrb[0].mxu0
    %661 = vdwg.mxu0
    %v662 = vadd.f32 %v450, %v616
    %v663 = vadd.f32 %v451, %v618
    %v664 = vxor.u32 %v662, 2147483648
    %v665 = vxor.u32 %v663, 2147483648
    %v666 = vmul.f32 %v664, 1.442695
    %v667 = vpow.pop %v666
    %v668 = vmul.f32 %v665, 1.442695
    %v669 = vpow.pop %v668
    %v670 = vadd.f32 %v667, 1.0
    %v671 = vadd.f32 %v669, 1.0
    %v672 = vrcp.pop %v670
    %v673 = vmul.f32 1.0, %v672
    %v674 = vrcp.pop %v671
    %v675 = vmul.f32 1.0, %v674
    %v676 = vadd.f32 %v657, %v449
    %v677 = vmul.f32 %v673, %v676
    %v678 = vadd.f32 %v452, %v677
    %v679 = vtanh.pop %v678
    %v680 = vsub.f32 1.0, %v675
    %v681 = vmul.f32 %v680, %v679
    %v682 = vmul.f32 %v675, 0.0
    %v683 = vadd.f32 %v681, %v682
    %v684 = vld [vmem:[#allocation2 + $0x18] sm:$0xff]
    %v685 = vld [vmem:[#allocation2 + $0x20] sm:$0xff]
    %v686 = vld [vmem:[#allocation2 + $0x28] sm:$0xff]
    %v687 = vpack.c.bf16 %v683, %v683
    %688 = vmatprep.subr.bf16.mxu0 %v534
    %689 = vmatpush1.bf16.msra.mxu0 %v533
    %690 = vmatprep.subr.bf16.mxu0 %v537
    %691 = vmatpush1.bf16.msra.mxu0 %v536
    %692 = vmatprep.subr.bf16.mxu0 %v540
    %693 = vmatpush1.bf16.msra.mxu0 %v539
    %694 = vmatprep.subr.bf16.mxu0 %v543
    %695 = vmatpush1.bf16.msra.mxu0 %v542
    %696 = vmatprep.subr.bf16.mxu0 %v546
    %697 = vmatpush1.bf16.msra.mxu0 %v545
    %698 = vmatprep.subr.bf16.mxu0 %v549
    %699 = vmatpush1.bf16.msra.mxu0 %v548
    %700 = vmatprep.subr.bf16.mxu0 %v552
    %701 = vmatpush1.bf16.msra.mxu0 %v551
    %702 = vmatprep.subr.bf16.mxu0 %v555
    %703 = vmatpush1.bf16.msra.mxu0 %v554
    %704 = vmatprep.subr.bf16.mxu0 0
    %705 = vmatpush1.bf16.msra.mxu0 0
    %706 = vmatprep.subr.bf16.mxu0 0
    %707 = vmatpush1.bf16.msra.mxu0 0
    %708 = vmatprep.subr.bf16.mxu0 0
    %709 = vmatpush1.bf16.msra.mxu0 0
    %710 = vmatprep.subr.bf16.mxu0 0
    %711 = vmatpush1.bf16.msra.mxu0 0
    %712 = vmatprep.subr.bf16.mxu0 0
    %713 = vmatpush1.bf16.msra.mxu0 0
    %714 = vmatprep.subr.bf16.mxu0 0
    %715 = vmatpush1.bf16.msra.mxu0 0
    %716 = vmatprep.subr.bf16.mxu0 0
    %717 = vmatpush1.bf16.msra.mxu0 0
    %718 = vmatprep.subr.bf16.mxu0 0
    %719 = vmatpush1.bf16.msra.mxu0 0
    %720 = vmatprep.mubr.bf16.mxu0 0
    %721 = vmatmul.mubr.bf16.gmra.mrb[0].mxu0 %v687
    %v722 = vpop.f32.mrb[0].mxu0
    %v723 = vadd.f32 0.0, %v722
    %v724 = vpop.f32.mrb[0].mxu0
    %v725 = vadd.f32 0.0, %v724
    %v726 = vpop.f32.mrb[0].mxu0
    %v727 = vpop.f32.mrb[0].mxu0
    %728 = vdwg.mxu0
    %729 = vmatprep.subr.bf16.mxu0 0
    %730 = vmatpush1.bf16.msra.mxu0 %v535
    %731 = vmatprep.subr.bf16.mxu0 0
    %732 = vmatpush1.bf16.msra.mxu0 %v538
    %733 = vmatprep.subr.bf16.mxu0 0
    %734 = vmatpush1.bf16.msra.mxu0 %v541
    %735 = vmatprep.subr.bf16.mxu0 0
    %736 = vmatpush1.bf16.msra.mxu0 %v544
    %737 = vmatprep.subr.bf16.mxu0 0
    %738 = vmatpush1.bf16.msra.mxu0 %v547
    %739 = vmatprep.subr.bf16.mxu0 0
    %740 = vmatpush1.bf16.msra.mxu0 %v550
    %741 = vmatprep.subr.bf16.mxu0 0
    %742 = vmatpush1.bf16.msra.mxu0 %v553
    %743 = vmatprep.subr.bf16.mxu0 0
    %744 = vmatpush1.bf16.msra.mxu0 %v556
    %745 = vmatprep.subr.bf16.mxu0 0
    %746 = vmatpush1.bf16.msra.mxu0 0
    %747 = vmatprep.subr.bf16.mxu0 0
    %748 = vmatpush1.bf16.msra.mxu0 0
    %749 = vmatprep.subr.bf16.mxu0 0
    %750 = vmatpush1.bf16.msra.mxu0 0
    %751 = vmatprep.subr.bf16.mxu0 0
    %752 = vmatpush1.bf16.msra.mxu0 0
    %753 = vmatprep.subr.bf16.mxu0 0
    %754 = vmatpush1.bf16.msra.mxu0 0
    %755 = vmatprep.subr.bf16.mxu0 0
    %756 = vmatpush1.bf16.msra.mxu0 0
    %757 = vmatprep.subr.bf16.mxu0 0
    %758 = vmatpush1.bf16.msra.mxu0 0
    %759 = vmatprep.subr.bf16.mxu0 0
    %760 = vmatpush1.bf16.msra.mxu0 0
    %761 = vmatprep.mubr.bf16.mxu0 0
    %762 = vmatmul.mubr.bf16.gmra.mrb[0].mxu0 %v687
    %v763 = vpop.f32.mrb[0].mxu0
    %v764 = vadd.f32 0.0, %v763
    %v765 = vpop.f32.mrb[0].mxu0
    %v766 = vpop.f32.mrb[0].mxu0
    %v767 = vpop.f32.mrb[0].mxu0
    %768 = vdwg.mxu0
    %v769 = vadd.f32 %v684, %v723
    %v770 = vadd.f32 %v685, %v725
    %v771 = vxor.u32 %v769, 2147483648
    %v772 = vxor.u32 %v770, 2147483648
    %v773 = vmul.f32 %v771, 1.442695
    %v774 = vpow.pop %v773
    %v775 = vmul.f32 %v772, 1.442695
    %v776 = vpow.pop %v775
    %v777 = vadd.f32 %v774, 1.0
    %v778 = vadd.f32 %v776, 1.0
    %v779 = vrcp.pop %v777
    %v780 = vmul.f32 1.0, %v779
    %v781 = vrcp.pop %v778
    %v782 = vmul.f32 1.0, %v781
    %v783 = vadd.f32 %v764, %v449
    %v784 = vmul.f32 %v780, %v783
    %v785 = vadd.f32 %v686, %v784
    %v786 = vtanh.pop %v785
    %v787 = vsub.f32 1.0, %v782
    %v788 = vmul.f32 %v787, %v786
    %v789 = vmul.f32 %v782, %v683
    %v790 = vadd.f32 %v788, %v789
    %v791 = vld [vmem:[#allocation2 + $0x30] sm:$0xff]
    %v792 = vld [vmem:[#allocation2 + $0x38] sm:$0xff]
    %v793 = vld [vmem:[#allocation2 + $0x40] sm:$0xff]
    %v794 = vpack.c.bf16 %v790, %v790
    %795 = vmatprep.subr.bf16.mxu0 %v534
    %796 = vmatpush1.bf16.msra.mxu0 %v533
    %797 = vmatprep.subr.bf16.mxu0 %v537
    %798 = vmatpush1.bf16.msra.mxu0 %v536
    %799 = vmatprep.subr.bf16.mxu0 %v540
    %800 = vmatpush1.bf16.msra.mxu0 %v539
    %801 = vmatprep.subr.bf16.mxu0 %v543
    %802 = vmatpush1.bf16.msra.mxu0 %v542
    %803 = vmatprep.subr.bf16.mxu0 %v546
    %804 = vmatpush1.bf16.msra.mxu0 %v545
    %805 = vmatprep.subr.bf16.mxu0 %v549
    %806 = vmatpush1.bf16.msra.mxu0 %v548
    %807 = vmatprep.subr.bf16.mxu0 %v552
    %808 = vmatpush1.bf16.msra.mxu0 %v551
    %809 = vmatprep.subr.bf16.mxu0 %v555
    %810 = vmatpush1.bf16.msra.mxu0 %v554
    %811 = vmatprep.subr.bf16.mxu0 0
    %812 = vmatpush1.bf16.msra.mxu0 0
    %813 = vmatprep.subr.bf16.mxu0 0
    %814 = vmatpush1.bf16.msra.mxu0 0
    %815 = vmatprep.subr.bf16.mxu0 0
    %816 = vmatpush1.bf16.msra.mxu0 0
    %817 = vmatprep.subr.bf16.mxu0 0
    %818 = vmatpush1.bf16.msra.mxu0 0
    %819 = vmatprep.subr.bf16.mxu0 0
    %820 = vmatpush1.bf16.msra.mxu0 0
    %821 = vmatprep.subr.bf16.mxu0 0
    %822 = vmatpush1.bf16.msra.mxu0 0
    %823 = vmatprep.subr.bf16.mxu0 0
    %824 = vmatpush1.bf16.msra.mxu0 0
    %825 = vmatprep.subr.bf16.mxu0 0
    %826 = vmatpush1.bf16.msra.mxu0 0
    %827 = vmatprep.mubr.bf16.mxu0 0
    %828 = vmatmul.mubr.bf16.gmra.mrb[0].mxu0 %v794
    %v829 = vpop.f32.mrb[0].mxu0
    %v830 = vadd.f32 0.0, %v829
    %v831 = vpop.f32.mrb[0].mxu0
    %v832 = vadd.f32 0.0, %v831
    %v833 = vpop.f32.mrb[0].mxu0
    %v834 = vpop.f32.mrb[0].mxu0
    %835 = vdwg.mxu0
    %836 = vmatprep.subr.bf16.mxu0 0
    %837 = vmatpush1.bf16.msra.mxu0 %v535
    %838 = vmatprep.subr.bf16.mxu0 0
    %839 = vmatpush1.bf16.msra.mxu0 %v538
    %840 = vmatprep.subr.bf16.mxu0 0
    %841 = vmatpush1.bf16.msra.mxu0 %v541
    %842 = vmatprep.subr.bf16.mxu0 0
    %843 = vmatpush1.bf16.msra.mxu0 %v544
    %844 = vmatprep.subr.bf16.mxu0 0
    %845 = vmatpush1.bf16.msra.mxu0 %v547
    %846 = vmatprep.subr.bf16.mxu0 0
    %847 = vmatpush1.bf16.msra.mxu0 %v550
    %848 = vmatprep.subr.bf16.mxu0 0
    %849 = vmatpush1.bf16.msra.mxu0 %v553
    %850 = vmatprep.subr.bf16.mxu0 0
    %851 = vmatpush1.bf16.msra.mxu0 %v556
    %852 = vmatprep.subr.bf16.mxu0 0
    %853 = vmatpush1.bf16.msra.mxu0 0
    %854 = vmatprep.subr.bf16.mxu0 0
    %855 = vmatpush1.bf16.msra.mxu0 0
    %856 = vmatprep.subr.bf16.mxu0 0
    %857 = vmatpush1.bf16.msra.mxu0 0
    %858 = vmatprep.subr.bf16.mxu0 0
    %859 = vmatpush1.bf16.msra.mxu0 0
    %860 = vmatprep.subr.bf16.mxu0 0
    %861 = vmatpush1.bf16.msra.mxu0 0
    %862 = vmatprep.subr.bf16.mxu0 0
    %863 = vmatpush1.bf16.msra.mxu0 0
    %864 = vmatprep.subr.bf16.mxu0 0
    %865 = vmatpush1.bf16.msra.mxu0 0
    %866 = vmatprep.subr.bf16.mxu0 0
    %867 = vmatpush1.bf16.msra.mxu0 0
    %868 = vmatprep.mubr.bf16.mxu0 0
    %869 = vmatmul.mubr.bf16.gmra.mrb[0].mxu0 %v794
    %v870 = vpop.f32.mrb[0].mxu0
    %v871 = vadd.f32 0.0, %v870
    %v872 = vpop.f32.mrb[0].mxu0
    %v873 = vpop.f32.mrb[0].mxu0
    %v874 = vpop.f32.mrb[0].mxu0
    %875 = vdwg.mxu0
    %v876 = vadd.f32 %v791, %v830
    %v877 = vadd.f32 %v792, %v832
    %v878 = vxor.u32 %v876, 2147483648
    %v879 = vxor.u32 %v877, 2147483648
    %v880 = vmul.f32 %v878, 1.442695
    %v881 = vpow.pop %v880
    %v882 = vmul.f32 %v879, 1.442695
    %v883 = vpow.pop %v882
    %v884 = vadd.f32 %v881, 1.0
    %v885 = vadd.f32 %v883, 1.0
    %v886 = vrcp.pop %v884
    %v887 = vmul.f32 1.0, %v886
    %v888 = vrcp.pop %v885
    %v889 = vmul.f32 1.0, %v888
    %v890 = vadd.f32 %v871, %v449
    %v891 = vmul.f32 %v887, %v890
    %v892 = vadd.f32 %v793, %v891
    %v893 = vtanh.pop %v892
    %v894 = vsub.f32 1.0, %v889
    %v895 = vmul.f32 %v894, %v893
    %v896 = vmul.f32 %v889, %v790
    %v897 = vadd.f32 %v895, %v896
    %v898 = vld [vmem:[#allocation2 + $0x48] sm:$0xff]
    %v899 = vld [vmem:[#allocation2 + $0x50] sm:$0xff]
    %v900 = vld [vmem:[#allocation2 + $0x58] sm:$0xff]
    %v901 = vpack.c.bf16 %v897, %v897
    %902 = vmatprep.subr.bf16.mxu0 %v534
    %903 = vmatpush1.bf16.msra.mxu0 %v533
    %904 = vmatprep.subr.bf16.mxu0 %v537
    %905 = vmatpush1.bf16.msra.mxu0 %v536
    %906 = vmatprep.subr.bf16.mxu0 %v540
    %907 = vmatpush1.bf16.msra.mxu0 %v539
    %908 = vmatprep.subr.bf16.mxu0 %v543
    %909 = vmatpush1.bf16.msra.mxu0 %v542
    %910 = vmatprep.subr.bf16.mxu0 %v546
    %911 = vmatpush1.bf16.msra.mxu0 %v545
    %912 = vmatprep.subr.bf16.mxu0 %v549
    %913 = vmatpush1.bf16.msra.mxu0 %v548
    %914 = vmatprep.subr.bf16.mxu0 %v552
    %915 = vmatpush1.bf16.msra.mxu0 %v551
    %916 = vmatprep.subr.bf16.mxu0 %v555
    %917 = vmatpush1.bf16.msra.mxu0 %v554
    %918 = vmatprep.subr.bf16.mxu0 0
    %919 = vmatpush1.bf16.msra.mxu0 0
    %920 = vmatprep.subr.bf16.mxu0 0
    %921 = vmatpush1.bf16.msra.mxu0 0
    %922 = vmatprep.subr.bf16.mxu0 0
    %923 = vmatpush1.bf16.msra.mxu0 0
    %924 = vmatprep.subr.bf16.mxu0 0
    %925 = vmatpush1.bf16.msra.mxu0 0
    %926 = vmatprep.subr.bf16.mxu0 0
    %927 = vmatpush1.bf16.msra.mxu0 0
    %928 = vmatprep.subr.bf16.mxu0 0
    %929 = vmatpush1.bf16.msra.mxu0 0
    %930 = vmatprep.subr.bf16.mxu0 0
    %931 = vmatpush1.bf16.msra.mxu0 0
    %932 = vmatprep.subr.bf16.mxu0 0
    %933 = vmatpush1.bf16.msra.mxu0 0
    %934 = vmatprep.mubr.bf16.mxu0 0
    %935 = vmatmul.mubr.bf16.gmra.mrb[0].mxu0 %v901
    %v936 = vpop.f32.mrb[0].mxu0
    %v937 = vadd.f32 0.0, %v936
    %v938 = vpop.f32.mrb[0].mxu0
    %v939 = vadd.f32 0.0, %v938
    %v940 = vpop.f32.mrb[0].mxu0
    %v941 = vpop.f32.mrb[0].mxu0
    %942 = vdwg.mxu0
    %943 = vmatprep.subr.bf16.mxu0 0
    %944 = vmatpush1.bf16.msra.mxu0 %v535
    %945 = vmatprep.subr.bf16.mxu0 0
    %946 = vmatpush1.bf16.msra.mxu0 %v538
    %947 = vmatprep.subr.bf16.mxu0 0
    %948 = vmatpush1.bf16.msra.mxu0 %v541
    %949 = vmatprep.subr.bf16.mxu0 0
    %950 = vmatpush1.bf16.msra.mxu0 %v544
    %951 = vmatprep.subr.bf16.mxu0 0
    %952 = vmatpush1.bf16.msra.mxu0 %v547
    %953 = vmatprep.subr.bf16.mxu0 0
    %954 = vmatpush1.bf16.msra.mxu0 %v550
    %955 = vmatprep.subr.bf16.mxu0 0
    %956 = vmatpush1.bf16.msra.mxu0 %v553
    %957 = vmatprep.subr.bf16.mxu0 0
    %958 = vmatpush1.bf16.msra.mxu0 %v556
    %959 = vmatprep.subr.bf16.mxu0 0
    %960 = vmatpush1.bf16.msra.mxu0 0
    %961 = vmatprep.subr.bf16.mxu0 0
    %962 = vmatpush1.bf16.msra.mxu0 0
    %963 = vmatprep.subr.bf16.mxu0 0
    %964 = vmatpush1.bf16.msra.mxu0 0
    %965 = vmatprep.subr.bf16.mxu0 0
    %966 = vmatpush1.bf16.msra.mxu0 0
    %967 = vmatprep.subr.bf16.mxu0 0
    %968 = vmatpush1.bf16.msra.mxu0 0
    %969 = vmatprep.subr.bf16.mxu0 0
    %970 = vmatpush1.bf16.msra.mxu0 0
    %971 = vmatprep.subr.bf16.mxu0 0
    %972 = vmatpush1.bf16.msra.mxu0 0
    %973 = vmatprep.subr.bf16.mxu0 0
    %974 = vmatpush1.bf16.msra.mxu0 0
    %975 = vmatprep.mubr.bf16.mxu0 0
    %976 = vmatmul.mubr.bf16.gmra.mrb[0].mxu0 %v901
    %v977 = vpop.f32.mrb[0].mxu0
    %v978 = vadd.f32 0.0, %v977
    %v979 = vpop.f32.mrb[0].mxu0
    %v980 = vpop.f32.mrb[0].mxu0
    %v981 = vpop.f32.mrb[0].mxu0
    %982 = vdwg.mxu0
    %v983 = vadd.f32 %v898, %v937
    %v984 = vadd.f32 %v899, %v939
    %v985 = vxor.u32 %v983, 2147483648
    %v986 = vxor.u32 %v984, 2147483648
    %v987 = vmul.f32 %v985, 1.442695
    %v988 = vpow.pop %v987
    %v989 = vmul.f32 %v986, 1.442695
    %v990 = vpow.pop %v989
    %v991 = vadd.f32 %v988, 1.0
    %v992 = vadd.f32 %v990, 1.0
    %v993 = vrcp.pop %v991
    %v994 = vmul.f32 1.0, %v993
    %v995 = vrcp.pop %v992
    %v996 = vmul.f32 1.0, %v995
    %v997 = vadd.f32 %v978, %v449
    %v998 = vmul.f32 %v994, %v997
    %v999 = vadd.f32 %v900, %v998
    %v1000 = vtanh.pop %v999
    %v1001 = vsub.f32 1.0, %v996
    %v1002 = vmul.f32 %v1001, %v1000
    %v1003 = vmul.f32 %v996, %v897
    %v1004 = vadd.f32 %v1002, %v1003
    %v1005 = vld [vmem:[#allocation2 + $0x60] sm:$0xff]
    %v1006 = vld [vmem:[#allocation2 + $0x68] sm:$0xff]
    %v1007 = vld [vmem:[#allocation2 + $0x70] sm:$0xff]
    %v1008 = vpack.c.bf16 %v1004, %v1004
    %1009 = vmatprep.subr.bf16.mxu0 %v534
    %1010 = vmatpush1.bf16.msra.mxu0 %v533
    %1011 = vmatprep.subr.bf16.mxu0 %v537
    %1012 = vmatpush1.bf16.msra.mxu0 %v536
    %1013 = vmatprep.subr.bf16.mxu0 %v540
    %1014 = vmatpush1.bf16.msra.mxu0 %v539
    %1015 = vmatprep.subr.bf16.mxu0 %v543
    %1016 = vmatpush1.bf16.msra.mxu0 %v542
    %1017 = vmatprep.subr.bf16.mxu0 %v546
    %1018 = vmatpush1.bf16.msra.mxu0 %v545
    %1019 = vmatprep.subr.bf16.mxu0 %v549
    %1020 = vmatpush1.bf16.msra.mxu0 %v548
    %1021 = vmatprep.subr.bf16.mxu0 %v552
    %1022 = vmatpush1.bf16.msra.mxu0 %v551
    %1023 = vmatprep.subr.bf16.mxu0 %v555
    %1024 = vmatpush1.bf16.msra.mxu0 %v554
    %1025 = vmatprep.subr.bf16.mxu0 0
    %1026 = vmatpush1.bf16.msra.mxu0 0
    %1027 = vmatprep.subr.bf16.mxu0 0
    %1028 = vmatpush1.bf16.msra.mxu0 0
    %1029 = vmatprep.subr.bf16.mxu0 0
    %1030 = vmatpush1.bf16.msra.mxu0 0
    %1031 = vmatprep.subr.bf16.mxu0 0
    %1032 = vmatpush1.bf16.msra.mxu0 0
    %1033 = vmatprep.subr.bf16.mxu0 0
    %1034 = vmatpush1.bf16.msra.mxu0 0
    %1035 = vmatprep.subr.bf16.mxu0 0
    %1036 = vmatpush1.bf16.msra.mxu0 0
    %1037 = vmatprep.subr.bf16.mxu0 0
    %1038 = vmatpush1.bf16.msra.mxu0 0
    %1039 = vmatprep.subr.bf16.mxu0 0
    %1040 = vmatpush1.bf16.msra.mxu0 0
    %1041 = vmatprep.mubr.bf16.mxu0 0
    %1042 = vmatmul.mubr.bf16.gmra.mrb[0].mxu0 %v1008
    %v1043 = vpop.f32.mrb[0].mxu0
    %v1044 = vadd.f32 0.0, %v1043
    %v1045 = vpop.f32.mrb[0].mxu0
    %v1046 = vadd.f32 0.0, %v1045
    %v1047 = vpop.f32.mrb[0].mxu0
    %v1048 = vpop.f32.mrb[0].mxu0
    %1049 = vdwg.mxu0
    %1050 = vmatprep.subr.bf16.mxu0 0
    %1051 = vmatpush1.bf16.msra.mxu0 %v535
    %1052 = vmatprep.subr.bf16.mxu0 0
    %1053 = vmatpush1.bf16.msra.mxu0 %v538
    %1054 = vmatprep.subr.bf16.mxu0 0
    %1055 = vmatpush1.bf16.msra.mxu0 %v541
    %1056 = vmatprep.subr.bf16.mxu0 0
    %1057 = vmatpush1.bf16.msra.mxu0 %v544
    %1058 = vmatprep.subr.bf16.mxu0 0
    %1059 = vmatpush1.bf16.msra.mxu0 %v547
    %1060 = vmatprep.subr.bf16.mxu0 0
    %1061 = vmatpush1.bf16.msra.mxu0 %v550
    %1062 = vmatprep.subr.bf16.mxu0 0
    %1063 = vmatpush1.bf16.msra.mxu0 %v553
    %1064 = vmatprep.subr.bf16.mxu0 0
    %1065 = vmatpush1.bf16.msra.mxu0 %v556
    %1066 = vmatprep.subr.bf16.mxu0 0
    %1067 = vmatpush1.bf16.msra.mxu0 0
    %1068 = vmatprep.subr.bf16.mxu0 0
    %1069 = vmatpush1.bf16.msra.mxu0 0
    %1070 = vmatprep.subr.bf16.mxu0 0
    %1071 = vmatpush1.bf16.msra.mxu0 0
    %1072 = vmatprep.subr.bf16.mxu0 0
    %1073 = vmatpush1.bf16.msra.mxu0 0
    %1074 = vmatprep.subr.bf16.mxu0 0
    %1075 = vmatpush1.bf16.msra.mxu0 0
    %1076 = vmatprep.subr.bf16.mxu0 0
    %1077 = vmatpush1.bf16.msra.mxu0 0
    %1078 = vmatprep.subr.bf16.mxu0 0
    %1079 = vmatpush1.bf16.msra.mxu0 0
    %1080 = vmatprep.subr.bf16.mxu0 0
    %1081 = vmatpush1.bf16.msra.mxu0 0
    %1082 = vmatprep.mubr.bf16.mxu0 0
    %1083 = vmatmul.mubr.bf16.gmra.mrb[0].mxu0 %v1008
    %v1084 = vpop.f32.mrb[0].mxu0
    %v1085 = vadd.f32 0.0, %v1084
    %v1086 = vpop.f32.mrb[0].mxu0
    %v1087 = vpop.f32.mrb[0].mxu0
    %v1088 = vpop.f32.mrb[0].mxu0
    %1089 = vdwg.mxu0
    %v1090 = vadd.f32 %v1005, %v1044
    %v1091 = vadd.f32 %v1006, %v1046
    %v1092 = vxor.u32 %v1090, 2147483648
    %v1093 = vxor.u32 %v1091, 2147483648
    %v1094 = vmul.f32 %v1092, 1.442695
    %v1095 = vpow.pop %v1094
    %v1096 = vmul.f32 %v1093, 1.442695
    %v1097 = vpow.pop %v1096
    %v1098 = vadd.f32 %v1095, 1.0
    %v1099 = vadd.f32 %v1097, 1.0
    %v1100 = vrcp.pop %v1098
    %v1101 = vmul.f32 1.0, %v1100
    %v1102 = vrcp.pop %v1099
    %v1103 = vmul.f32 1.0, %v1102
    %v1104 = vadd.f32 %v1085, %v449
    %v1105 = vmul.f32 %v1101, %v1104
    %v1106 = vadd.f32 %v1007, %v1105
    %v1107 = vtanh.pop %v1106
    %v1108 = vsub.f32 1.0, %v1103
    %v1109 = vmul.f32 %v1108, %v1107
    %v1110 = vmul.f32 %v1103, %v1004
    %v1111 = vadd.f32 %v1109, %v1110
    %v1112 = vld [vmem:[#allocation2 + $0x78] sm:$0xff]
    %v1113 = vld [vmem:[#allocation2 + $0x80] sm:$0xff]
    %v1114 = vld [vmem:[#allocation2 + $0x88] sm:$0xff]
    %v1115 = vpack.c.bf16 %v1111, %v1111
    %1116 = vmatprep.subr.bf16.mxu0 %v534
    %1117 = vmatpush1.bf16.msra.mxu0 %v533
    %1118 = vmatprep.subr.bf16.mxu0 %v537
    %1119 = vmatpush1.bf16.msra.mxu0 %v536
    %1120 = vmatprep.subr.bf16.mxu0 %v540
    %1121 = vmatpush1.bf16.msra.mxu0 %v539
    %1122 = vmatprep.subr.bf16.mxu0 %v543
    %1123 = vmatpush1.bf16.msra.mxu0 %v542
    %1124 = vmatprep.subr.bf16.mxu0 %v546
    %1125 = vmatpush1.bf16.msra.mxu0 %v545
    %1126 = vmatprep.subr.bf16.mxu0 %v549
    %1127 = vmatpush1.bf16.msra.mxu0 %v548
    %1128 = vmatprep.subr.bf16.mxu0 %v552
    %1129 = vmatpush1.bf16.msra.mxu0 %v551
    %1130 = vmatprep.subr.bf16.mxu0 %v555
    %1131 = vmatpush1.bf16.msra.mxu0 %v554
    %1132 = vmatprep.subr.bf16.mxu0 0
    %1133 = vmatpush1.bf16.msra.mxu0 0
    %1134 = vmatprep.subr.bf16.mxu0 0
    %1135 = vmatpush1.bf16.msra.mxu0 0
    %1136 = vmatprep.subr.bf16.mxu0 0
    %1137 = vmatpush1.bf16.msra.mxu0 0
    %1138 = vmatprep.subr.bf16.mxu0 0
    %1139 = vmatpush1.bf16.msra.mxu0 0
    %1140 = vmatprep.subr.bf16.mxu0 0
    %1141 = vmatpush1.bf16.msra.mxu0 0
    %1142 = vmatprep.subr.bf16.mxu0 0
    %1143 = vmatpush1.bf16.msra.mxu0 0
    %1144 = vmatprep.subr.bf16.mxu0 0
    %1145 = vmatpush1.bf16.msra.mxu0 0
    %1146 = vmatprep.subr.bf16.mxu0 0
    %1147 = vmatpush1.bf16.msra.mxu0 0
    %1148 = vmatprep.mubr.bf16.mxu0 0
    %1149 = vmatmul.mubr.bf16.gmra.mrb[0].mxu0 %v1115
    %v1150 = vpop.f32.mrb[0].mxu0
    %v1151 = vadd.f32 0.0, %v1150
    %v1152 = vpop.f32.mrb[0].mxu0
    %v1153 = vadd.f32 0.0, %v1152
    %v1154 = vpop.f32.mrb[0].mxu0
    %v1155 = vpop.f32.mrb[0].mxu0
    %1156 = vdwg.mxu0
    %1157 = vmatprep.subr.bf16.mxu0 0
    %1158 = vmatpush1.bf16.msra.mxu0 %v535
    %1159 = vmatprep.subr.bf16.mxu0 0
    %1160 = vmatpush1.bf16.msra.mxu0 %v538
    %1161 = vmatprep.subr.bf16.mxu0 0
    %1162 = vmatpush1.bf16.msra.mxu0 %v541
    %1163 = vmatprep.subr.bf16.mxu0 0
    %1164 = vmatpush1.bf16.msra.mxu0 %v544
    %1165 = vmatprep.subr.bf16.mxu0 0
    %1166 = vmatpush1.bf16.msra.mxu0 %v547
    %1167 = vmatprep.subr.bf16.mxu0 0
    %1168 = vmatpush1.bf16.msra.mxu0 %v550
    %1169 = vmatprep.subr.bf16.mxu0 0
    %1170 = vmatpush1.bf16.msra.mxu0 %v553
    %1171 = vmatprep.subr.bf16.mxu0 0
    %1172 = vmatpush1.bf16.msra.mxu0 %v556
    %1173 = vmatprep.subr.bf16.mxu0 0
    %1174 = vmatpush1.bf16.msra.mxu0 0
    %1175 = vmatprep.subr.bf16.mxu0 0
    %1176 = vmatpush1.bf16.msra.mxu0 0
    %1177 = vmatprep.subr.bf16.mxu0 0
    %1178 = vmatpush1.bf16.msra.mxu0 0
    %1179 = vmatprep.subr.bf16.mxu0 0
    %1180 = vmatpush1.bf16.msra.mxu0 0
    %1181 = vmatprep.subr.bf16.mxu0 0
    %1182 = vmatpush1.bf16.msra.mxu0 0
    %1183 = vmatprep.subr.bf16.mxu0 0
    %1184 = vmatpush1.bf16.msra.mxu0 0
    %1185 = vmatprep.subr.bf16.mxu0 0
    %1186 = vmatpush1.bf16.msra.mxu0 0
    %1187 = vmatprep.subr.bf16.mxu0 0
    %1188 = vmatpush1.bf16.msra.mxu0 0
    %1189 = vmatprep.mubr.bf16.mxu0 0
    %1190 = vmatmul.mubr.bf16.gmra.mrb[0].mxu0 %v1115
    %v1191 = vpop.f32.mrb[0].mxu0
    %v1192 = vadd.f32 0.0, %v1191
    %v1193 = vpop.f32.mrb[0].mxu0
    %v1194 = vpop.f32.mrb[0].mxu0
    %v1195 = vpop.f32.mrb[0].mxu0
    %1196 = vdwg.mxu0
    %v1197 = vadd.f32 %v1112, %v1151
    %v1198 = vadd.f32 %v1113, %v1153
    %v1199 = vxor.u32 %v1197, 2147483648
    %v1200 = vxor.u32 %v1198, 2147483648
    %v1201 = vmul.f32 %v1199, 1.442695
    %v1202 = vpow.pop %v1201
    %v1203 = vmul.f32 %v1200, 1.442695
    %v1204 = vpow.pop %v1203
    %v1205 = vadd.f32 %v1202, 1.0
    %v1206 = vadd.f32 %v1204, 1.0
    %v1207 = vrcp.pop %v1205
    %v1208 = vmul.f32 1.0, %v1207
    %v1209 = vrcp.pop %v1206
    %v1210 = vmul.f32 1.0, %v1209
    %v1211 = vadd.f32 %v1192, %v449
    %v1212 = vmul.f32 %v1208, %v1211
    %v1213 = vadd.f32 %v1114, %v1212
    %v1214 = vtanh.pop %v1213
    %v1215 = vsub.f32 1.0, %v1210
    %v1216 = vmul.f32 %v1215, %v1214
    %v1217 = vmul.f32 %v1210, %v1111
    %v1218 = vadd.f32 %v1216, %v1217
    %vm1219 = vcmask 785920
    %1220 = vst.msk [vmem:[#allocation3 + $0x8] sm:$0xff] %vm1219, %v1218
    %v1221 = vld [vmem:[#allocation2 + $0x90] sm:$0xff]
    %v1222 = vld [vmem:[#allocation2 + $0x98] sm:$0xff]
    %v1223 = vld [vmem:[#allocation2 + $0xa0] sm:$0xff]
    %v1224 = vpack.c.bf16 %v1218, %v1218
    %1225 = vmatprep.subr.bf16.mxu0 %v534
    %1226 = vmatpush1.bf16.msra.mxu0 %v533
    %1227 = vmatprep.subr.bf16.mxu0 %v537
    %1228 = vmatpush1.bf16.msra.mxu0 %v536
    %1229 = vmatprep.subr.bf16.mxu0 %v540
    %1230 = vmatpush1.bf16.msra.mxu0 %v539
    %1231 = vmatprep.subr.bf16.mxu0 %v543
    %1232 = vmatpush1.bf16.msra.mxu0 %v542
    %1233 = vmatprep.subr.bf16.mxu0 %v546
    %1234 = vmatpush1.bf16.msra.mxu0 %v545
    %1235 = vmatprep.subr.bf16.mxu0 %v549
    %1236 = vmatpush1.bf16.msra.mxu0 %v548
    %1237 = vmatprep.subr.bf16.mxu0 %v552
    %1238 = vmatpush1.bf16.msra.mxu0 %v551
    %1239 = vmatprep.subr.bf16.mxu0 %v555
    %1240 = vmatpush1.bf16.msra.mxu0 %v554
    %1241 = vmatprep.subr.bf16.mxu0 0
    %1242 = vmatpush1.bf16.msra.mxu0 0
    %1243 = vmatprep.subr.bf16.mxu0 0
    %1244 = vmatpush1.bf16.msra.mxu0 0
    %1245 = vmatprep.subr.bf16.mxu0 0
    %1246 = vmatpush1.bf16.msra.mxu0 0
    %1247 = vmatprep.subr.bf16.mxu0 0
    %1248 = vmatpush1.bf16.msra.mxu0 0
    %1249 = vmatprep.subr.bf16.mxu0 0
    %1250 = vmatpush1.bf16.msra.mxu0 0
    %1251 = vmatprep.subr.bf16.mxu0 0
    %1252 = vmatpush1.bf16.msra.mxu0 0
    %1253 = vmatprep.subr.bf16.mxu0 0
    %1254 = vmatpush1.bf16.msra.mxu0 0
    %1255 = vmatprep.subr.bf16.mxu0 0
    %1256 = vmatpush1.bf16.msra.mxu0 0
    %1257 = vmatprep.mubr.bf16.mxu0 0
    %1258 = vmatmul.mubr.bf16.gmra.mrb[0].mxu0 %v1224
    %v1259 = vpop.f32.mrb[0].mxu0
    %v1260 = vadd.f32 0.0, %v1259
    %v1261 = vpop.f32.mrb[0].mxu0
    %v1262 = vadd.f32 0.0, %v1261
    %v1263 = vpop.f32.mrb[0].mxu0
    %v1264 = vpop.f32.mrb[0].mxu0
    %1265 = vdwg.mxu0
    %1266 = vmatprep.subr.bf16.mxu0 0
    %1267 = vmatpush1.bf16.msra.mxu0 %v535
    %1268 = vmatprep.subr.bf16.mxu0 0
    %1269 = vmatpush1.bf16.msra.mxu0 %v538
    %1270 = vmatprep.subr.bf16.mxu0 0
    %1271 = vmatpush1.bf16.msra.mxu0 %v541
    %1272 = vmatprep.subr.bf16.mxu0 0
    %1273 = vmatpush1.bf16.msra.mxu0 %v544
    %1274 = vmatprep.subr.bf16.mxu0 0
    %1275 = vmatpush1.bf16.msra.mxu0 %v547
    %1276 = vmatprep.subr.bf16.mxu0 0
    %1277 = vmatpush1.bf16.msra.mxu0 %v550
    %1278 = vmatprep.subr.bf16.mxu0 0
    %1279 = vmatpush1.bf16.msra.mxu0 %v553
    %1280 = vmatprep.subr.bf16.mxu0 0
    %1281 = vmatpush1.bf16.msra.mxu0 %v556
    %1282 = vmatprep.subr.bf16.mxu0 0
    %1283 = vmatpush1.bf16.msra.mxu0 0
    %1284 = vmatprep.subr.bf16.mxu0 0
    %1285 = vmatpush1.bf16.msra.mxu0 0
    %1286 = vmatprep.subr.bf16.mxu0 0
    %1287 = vmatpush1.bf16.msra.mxu0 0
    %1288 = vmatprep.subr.bf16.mxu0 0
    %1289 = vmatpush1.bf16.msra.mxu0 0
    %1290 = vmatprep.subr.bf16.mxu0 0
    %1291 = vmatpush1.bf16.msra.mxu0 0
    %1292 = vmatprep.subr.bf16.mxu0 0
    %1293 = vmatpush1.bf16.msra.mxu0 0
    %1294 = vmatprep.subr.bf16.mxu0 0
    %1295 = vmatpush1.bf16.msra.mxu0 0
    %1296 = vmatprep.subr.bf16.mxu0 0
    %1297 = vmatpush1.bf16.msra.mxu0 0
    %1298 = vmatprep.mubr.bf16.mxu0 0
    %1299 = vmatmul.mubr.bf16.gmra.mrb[0].mxu0 %v1224
    %v1300 = vpop.f32.mrb[0].mxu0
    %v1301 = vadd.f32 0.0, %v1300
    %v1302 = vpop.f32.mrb[0].mxu0
    %v1303 = vpop.f32.mrb[0].mxu0
    %v1304 = vpop.f32.mrb[0].mxu0
    %1305 = vdwg.mxu0
    %v1306 = vadd.f32 %v1221, %v1260
    %v1307 = vadd.f32 %v1222, %v1262
    %v1308 = vxor.u32 %v1306, 2147483648
    %v1309 = vxor.u32 %v1307, 2147483648
    %v1310 = vmul.f32 %v1308, 1.442695
    %v1311 = vpow.pop %v1310
    %v1312 = vmul.f32 %v1309, 1.442695
    %v1313 = vpow.pop %v1312
    %v1314 = vadd.f32 %v1311, 1.0
    %v1315 = vadd.f32 %v1313, 1.0
    %v1316 = vrcp.pop %v1314
    %v1317 = vmul.f32 1.0, %v1316
    %v1318 = vrcp.pop %v1315
    %v1319 = vmul.f32 1.0, %v1318
    %v1320 = vadd.f32 %v1301, %v449
    %v1321 = vmul.f32 %v1317, %v1320
    %v1322 = vadd.f32 %v1223, %v1321
    %v1323 = vtanh.pop %v1322
    %v1324 = vsub.f32 1.0, %v1319
    %v1325 = vmul.f32 %v1324, %v1323
    %v1326 = vmul.f32 %v1319, %v1218
    %v1327 = vadd.f32 %v1325, %v1326
    %vm1328 = vcmask 523520
    %1329 = vst.msk [vmem:[#allocation3 + $0x8] sm:$0xff] %vm1328, %v1327
    %v1330 = vld [vmem:[#allocation2 + $0xa8] sm:$0xff]
    %v1331 = vld [vmem:[#allocation2 + $0xb0] sm:$0xff]
    %v1332 = vld [vmem:[#allocation2 + $0xb8] sm:$0xff]
    %v1333 = vpack.c.bf16 %v1327, %v1327
    %1334 = vmatprep.subr.bf16.mxu0 %v534
    %1335 = vmatpush1.bf16.msra.mxu0 %v533
    %1336 = vmatprep.subr.bf16.mxu0 %v537
    %1337 = vmatpush1.bf16.msra.mxu0 %v536
    %1338 = vmatprep.subr.bf16.mxu0 %v540
    %1339 = vmatpush1.bf16.msra.mxu0 %v539
    %1340 = vmatprep.subr.bf16.mxu0 %v543
    %1341 = vmatpush1.bf16.msra.mxu0 %v542
    %1342 = vmatprep.subr.bf16.mxu0 %v546
    %1343 = vmatpush1.bf16.msra.mxu0 %v545
    %1344 = vmatprep.subr.bf16.mxu0 %v549
    %1345 = vmatpush1.bf16.msra.mxu0 %v548
    %1346 = vmatprep.subr.bf16.mxu0 %v552
    %1347 = vmatpush1.bf16.msra.mxu0 %v551
    %1348 = vmatprep.subr.bf16.mxu0 %v555
    %1349 = vmatpush1.bf16.msra.mxu0 %v554
    %1350 = vmatprep.subr.bf16.mxu0 0
    %1351 = vmatpush1.bf16.msra.mxu0 0
    %1352 = vmatprep.subr.bf16.mxu0 0
    %1353 = vmatpush1.bf16.msra.mxu0 0
    %1354 = vmatprep.subr.bf16.mxu0 0
    %1355 = vmatpush1.bf16.msra.mxu0 0
    %1356 = vmatprep.subr.bf16.mxu0 0
    %1357 = vmatpush1.bf16.msra.mxu0 0
    %1358 = vmatprep.subr.bf16.mxu0 0
    %1359 = vmatpush1.bf16.msra.mxu0 0
    %1360 = vmatprep.subr.bf16.mxu0 0
    %1361 = vmatpush1.bf16.msra.mxu0 0
    %1362 = vmatprep.subr.bf16.mxu0 0
    %1363 = vmatpush1.bf16.msra.mxu0 0
    %1364 = vmatprep.subr.bf16.mxu0 0
    %1365 = vmatpush1.bf16.msra.mxu0 0
    %1366 = vmatprep.mubr.bf16.mxu0 0
    %1367 = vmatmul.mubr.bf16.gmra.mrb[0].mxu0 %v1333
    %v1368 = vpop.f32.mrb[0].mxu0
    %v1369 = vadd.f32 0.0, %v1368
    %v1370 = vpop.f32.mrb[0].mxu0
    %v1371 = vadd.f32 0.0, %v1370
    %v1372 = vpop.f32.mrb[0].mxu0
    %v1373 = vpop.f32.mrb[0].mxu0
    %1374 = vdwg.mxu0
    %1375 = vmatprep.subr.bf16.mxu0 0
    %1376 = vmatpush1.bf16.msra.mxu0 %v535
    %1377 = vmatprep.subr.bf16.mxu0 0
    %1378 = vmatpush1.bf16.msra.mxu0 %v538
    %1379 = vmatprep.subr.bf16.mxu0 0
    %1380 = vmatpush1.bf16.msra.mxu0 %v541
    %1381 = vmatprep.subr.bf16.mxu0 0
    %1382 = vmatpush1.bf16.msra.mxu0 %v544
    %1383 = vmatprep.subr.bf16.mxu0 0
    %1384 = vmatpush1.bf16.msra.mxu0 %v547
    %1385 = vmatprep.subr.bf16.mxu0 0
    %1386 = vmatpush1.bf16.msra.mxu0 %v550
    %1387 = vmatprep.subr.bf16.mxu0 0
    %1388 = vmatpush1.bf16.msra.mxu0 %v553
    %1389 = vmatprep.subr.bf16.mxu0 0
    %1390 = vmatpush1.bf16.msra.mxu0 %v556
    %1391 = vmatprep.subr.bf16.mxu0 0
    %1392 = vmatpush1.bf16.msra.mxu0 0
    %1393 = vmatprep.subr.bf16.mxu0 0
    %1394 = vmatpush1.bf16.msra.mxu0 0
    %1395 = vmatprep.subr.bf16.mxu0 0
    %1396 = vmatpush1.bf16.msra.mxu0 0
    %1397 = vmatprep.subr.bf16.mxu0 0
    %1398 = vmatpush1.bf16.msra.mxu0 0
    %1399 = vmatprep.subr.bf16.mxu0 0
    %1400 = vmatpush1.bf16.msra.mxu0 0
    %1401 = vmatprep.subr.bf16.mxu0 0
    %1402 = vmatpush1.bf16.msra.mxu0 0
    %1403 = vmatprep.subr.bf16.mxu0 0
    %1404 = vmatpush1.bf16.msra.mxu0 0
    %1405 = vmatprep.subr.bf16.mxu0 0
    %1406 = vmatpush1.bf16.msra.mxu0 0
    %1407 = vmatprep.mubr.bf16.mxu0 0
    %1408 = vmatmul.mubr.bf16.gmra.mrb[0].mxu0 %v1333
    %v1409 = vpop.f32.mrb[0].mxu0
    %v1410 = vadd.f32 0.0, %v1409
    %v1411 = vpop.f32.mrb[0].mxu0
    %v1412 = vpop.f32.mrb[0].mxu0
    %v1413 = vpop.f32.mrb[0].mxu0
    %1414 = vdwg.mxu0
    %v1415 = vadd.f32 %v1330, %v1369
    %v1416 = vadd.f32 %v1331, %v1371
    %v1417 = vxor.u32 %v1415, 2147483648
    %v1418 = vxor.u32 %v1416, 2147483648
    %v1419 = vmul.f32 %v1417, 1.442695
    %v1420 = vpow.pop %v1419
    %v1421 = vmul.f32 %v1418, 1.442695
    %v1422 = vpow.pop %v1421
    %v1423 = vadd.f32 %v1420, 1.0
    %v1424 = vadd.f32 %v1422, 1.0
    %v1425 = vrcp.pop %v1423
    %v1426 = vmul.f32 1.0, %v1425
    %v1427 = vrcp.pop %v1424
    %v1428 = vmul.f32 1.0, %v1427
    %v1429 = vadd.f32 %v1410, %v449
    %v1430 = vmul.f32 %v1426, %v1429
    %v1431 = vadd.f32 %v1332, %v1430
    %v1432 = vtanh.pop %v1431
    %v1433 = vsub.f32 1.0, %v1428
    %v1434 = vmul.f32 %v1433, %v1432
    %v1435 = vmul.f32 %v1428, %v1327
    %v1436 = vadd.f32 %v1434, %v1435
    %vm1437 = vcmask 261120
    %1438 = vst.msk [vmem:[#allocation3 + $0x8] sm:$0xff] %vm1437, %v1436
    %v1439 = vld [vmem:[#allocation2 + $0xc0] sm:$0xff]
    %v1440 = vld [vmem:[#allocation2 + $0xc8] sm:$0xff]
    %v1441 = vld [vmem:[#allocation2 + $0xd0] sm:$0xff]
    %v1442 = vpack.c.bf16 %v1436, %v1436
    %1443 = vmatprep.subr.bf16.mxu0 %v534
    %1444 = vmatpush1.bf16.msra.mxu0 %v533
    %1445 = vmatprep.subr.bf16.mxu0 %v537
    %1446 = vmatpush1.bf16.msra.mxu0 %v536
    %1447 = vmatprep.subr.bf16.mxu0 %v540
    %1448 = vmatpush1.bf16.msra.mxu0 %v539
    %1449 = vmatprep.subr.bf16.mxu0 %v543
    %1450 = vmatpush1.bf16.msra.mxu0 %v542
    %1451 = vmatprep.subr.bf16.mxu0 %v546
    %1452 = vmatpush1.bf16.msra.mxu0 %v545
    %1453 = vmatprep.subr.bf16.mxu0 %v549
    %1454 = vmatpush1.bf16.msra.mxu0 %v548
    %1455 = vmatprep.subr.bf16.mxu0 %v552
    %1456 = vmatpush1.bf16.msra.mxu0 %v551
    %1457 = vmatprep.subr.bf16.mxu0 %v555
    %1458 = vmatpush1.bf16.msra.mxu0 %v554
    %1459 = vmatprep.subr.bf16.mxu0 0
    %1460 = vmatpush1.bf16.msra.mxu0 0
    %1461 = vmatprep.subr.bf16.mxu0 0
    %1462 = vmatpush1.bf16.msra.mxu0 0
    %1463 = vmatprep.subr.bf16.mxu0 0
    %1464 = vmatpush1.bf16.msra.mxu0 0
    %1465 = vmatprep.subr.bf16.mxu0 0
    %1466 = vmatpush1.bf16.msra.mxu0 0
    %1467 = vmatprep.subr.bf16.mxu0 0
    %1468 = vmatpush1.bf16.msra.mxu0 0
    %1469 = vmatprep.subr.bf16.mxu0 0
    %1470 = vmatpush1.bf16.msra.mxu0 0
    %1471 = vmatprep.subr.bf16.mxu0 0
    %1472 = vmatpush1.bf16.msra.mxu0 0
    %1473 = vmatprep.subr.bf16.mxu0 0
    %1474 = vmatpush1.bf16.msra.mxu0 0
    %1475 = vmatprep.mubr.bf16.mxu0 0
    %1476 = vmatmul.mubr.bf16.gmra.mrb[0].mxu0 %v1442
    %v1477 = vpop.f32.mrb[0].mxu0
    %v1478 = vadd.f32 0.0, %v1477
    %v1479 = vpop.f32.mrb[0].mxu0
    %v1480 = vadd.f32 0.0, %v1479
    %v1481 = vpop.f32.mrb[0].mxu0
    %v1482 = vpop.f32.mrb[0].mxu0
    %1483 = vdwg.mxu0
    %1484 = vmatprep.subr.bf16.mxu0 0
    %1485 = vmatpush1.bf16.msra.mxu0 %v535
    %1486 = vmatprep.subr.bf16.mxu0 0
    %1487 = vmatpush1.bf16.msra.mxu0 %v538
    %1488 = vmatprep.subr.bf16.mxu0 0
    %1489 = vmatpush1.bf16.msra.mxu0 %v541
    %1490 = vmatprep.subr.bf16.mxu0 0
    %1491 = vmatpush1.bf16.msra.mxu0 %v544
    %1492 = vmatprep.subr.bf16.mxu0 0
    %1493 = vmatpush1.bf16.msra.mxu0 %v547
    %1494 = vmatprep.subr.bf16.mxu0 0
    %1495 = vmatpush1.bf16.msra.mxu0 %v550
    %1496 = vmatprep.subr.bf16.mxu0 0
    %1497 = vmatpush1.bf16.msra.mxu0 %v553
    %1498 = vmatprep.subr.bf16.mxu0 0
    %1499 = vmatpush1.bf16.msra.mxu0 %v556
    %1500 = vmatprep.subr.bf16.mxu0 0
    %1501 = vmatpush1.bf16.msra.mxu0 0
    %1502 = vmatprep.subr.bf16.mxu0 0
    %1503 = vmatpush1.bf16.msra.mxu0 0
    %1504 = vmatprep.subr.bf16.mxu0 0
    %1505 = vmatpush1.bf16.msra.mxu0 0
    %1506 = vmatprep.subr.bf16.mxu0 0
    %1507 = vmatpush1.bf16.msra.mxu0 0
    %1508 = vmatprep.subr.bf16.mxu0 0
    %1509 = vmatpush1.bf16.msra.mxu0 0
    %1510 = vmatprep.subr.bf16.mxu0 0
    %1511 = vmatpush1.bf16.msra.mxu0 0
    %1512 = vmatprep.subr.bf16.mxu0 0
    %1513 = vmatpush1.bf16.msra.mxu0 0
    %1514 = vmatprep.subr.bf16.mxu0 0
    %1515 = vmatpush1.bf16.msra.mxu0 0
    %1516 = vmatprep.mubr.bf16.mxu0 0
    %1517 = vmatmul.mubr.bf16.gmra.mrb[0].mxu0 %v1442
    %v1518 = vpop.f32.mrb[0].mxu0
    %v1519 = vadd.f32 0.0, %v1518
    %v1520 = vpop.f32.mrb[0].mxu0
    %v1521 = vpop.f32.mrb[0].mxu0
    %v1522 = vpop.f32.mrb[0].mxu0
    %1523 = vdwg.mxu0
    %v1524 = vadd.f32 %v1439, %v1478
    %v1525 = vadd.f32 %v1440, %v1480
    %v1526 = vxor.u32 %v1524, 2147483648
    %v1527 = vxor.u32 %v1525, 2147483648
    %v1528 = vmul.f32 %v1526, 1.442695
    %v1529 = vpow.pop %v1528
    %v1530 = vmul.f32 %v1527, 1.442695
    %v1531 = vpow.pop %v1530
    %v1532 = vadd.f32 %v1529, 1.0
    %v1533 = vadd.f32 %v1531, 1.0
    %v1534 = vrcp.pop %v1532
    %v1535 = vmul.f32 1.0, %v1534
    %v1536 = vrcp.pop %v1533
    %v1537 = vmul.f32 1.0, %v1536
    %v1538 = vadd.f32 %v1519, %v449
    %v1539 = vmul.f32 %v1535, %v1538
    %v1540 = vadd.f32 %v1441, %v1539
    %v1541 = vtanh.pop %v1540
    %v1542 = vsub.f32 1.0, %v1537
    %v1543 = vmul.f32 %v1542, %v1541
    %v1544 = vmul.f32 %v1537, %v1436
    %v1545 = vadd.f32 %v1543, %v1544
    %v1546 = vld [vmem:[#allocation2 + $0xd8] sm:$0xff]
    %v1547 = vld [vmem:[#allocation2 + $0xe0] sm:$0xff]
    %v1548 = vld [vmem:[#allocation2 + $0xe8] sm:$0xff]
    %v1549 = vpack.c.bf16 %v1545, %v1545
    %1550 = vmatprep.subr.bf16.mxu0 %v534
    %1551 = vmatpush1.bf16.msra.mxu0 %v533
    %1552 = vmatprep.subr.bf16.mxu0 %v537
    %1553 = vmatpush1.bf16.msra.mxu0 %v536
    %1554 = vmatprep.subr.bf16.mxu0 %v540
    %1555 = vmatpush1.bf16.msra.mxu0 %v539
    %1556 = vmatprep.subr.bf16.mxu0 %v543
    %1557 = vmatpush1.bf16.msra.mxu0 %v542
    %1558 = vmatprep.subr.bf16.mxu0 %v546
    %1559 = vmatpush1.bf16.msra.mxu0 %v545
    %1560 = vmatprep.subr.bf16.mxu0 %v549
    %1561 = vmatpush1.bf16.msra.mxu0 %v548
    %1562 = vmatprep.subr.bf16.mxu0 %v552
    %1563 = vmatpush1.bf16.msra.mxu0 %v551
    %1564 = vmatprep.subr.bf16.mxu0 %v555
    %1565 = vmatpush1.bf16.msra.mxu0 %v554
    %1566 = vmatprep.subr.bf16.mxu0 0
    %1567 = vmatpush1.bf16.msra.mxu0 0
    %1568 = vmatprep.subr.bf16.mxu0 0
    %1569 = vmatpush1.bf16.msra.mxu0 0
    %1570 = vmatprep.subr.bf16.mxu0 0
    %1571 = vmatpush1.bf16.msra.mxu0 0
    %1572 = vmatprep.subr.bf16.mxu0 0
    %1573 = vmatpush1.bf16.msra.mxu0 0
    %1574 = vmatprep.subr.bf16.mxu0 0
    %1575 = vmatpush1.bf16.msra.mxu0 0
    %1576 = vmatprep.subr.bf16.mxu0 0
    %1577 = vmatpush1.bf16.msra.mxu0 0
    %1578 = vmatprep.subr.bf16.mxu0 0
    %1579 = vmatpush1.bf16.msra.mxu0 0
    %1580 = vmatprep.subr.bf16.mxu0 0
    %1581 = vmatpush1.bf16.msra.mxu0 0
    %1582 = vmatprep.mubr.bf16.mxu0 0
    %1583 = vmatmul.mubr.bf16.gmra.mrb[0].mxu0 %v1549
    %v1584 = vpop.f32.mrb[0].mxu0
    %v1585 = vadd.f32 0.0, %v1584
    %v1586 = vpop.f32.mrb[0].mxu0
    %v1587 = vadd.f32 0.0, %v1586
    %v1588 = vpop.f32.mrb[0].mxu0
    %v1589 = vpop.f32.mrb[0].mxu0
    %1590 = vdwg.mxu0
    %1591 = vmatprep.subr.bf16.mxu0 0
    %1592 = vmatpush1.bf16.msra.mxu0 %v535
    %1593 = vmatprep.subr.bf16.mxu0 0
    %1594 = vmatpush1.bf16.msra.mxu0 %v538
    %1595 = vmatprep.subr.bf16.mxu0 0
    %1596 = vmatpush1.bf16.msra.mxu0 %v541
    %1597 = vmatprep.subr.bf16.mxu0 0
    %1598 = vmatpush1.bf16.msra.mxu0 %v544
    %1599 = vmatprep.subr.bf16.mxu0 0
    %1600 = vmatpush1.bf16.msra.mxu0 %v547
    %1601 = vmatprep.subr.bf16.mxu0 0
    %1602 = vmatpush1.bf16.msra.mxu0 %v550
    %1603 = vmatprep.subr.bf16.mxu0 0
    %1604 = vmatpush1.bf16.msra.mxu0 %v553
    %1605 = vmatprep.subr.bf16.mxu0 0
    %1606 = vmatpush1.bf16.msra.mxu0 %v556
    %1607 = vmatprep.subr.bf16.mxu0 0
    %1608 = vmatpush1.bf16.msra.mxu0 0
    %1609 = vmatprep.subr.bf16.mxu0 0
    %1610 = vmatpush1.bf16.msra.mxu0 0
    %1611 = vmatprep.subr.bf16.mxu0 0
    %1612 = vmatpush1.bf16.msra.mxu0 0
    %1613 = vmatprep.subr.bf16.mxu0 0
    %1614 = vmatpush1.bf16.msra.mxu0 0
    %1615 = vmatprep.subr.bf16.mxu0 0
    %1616 = vmatpush1.bf16.msra.mxu0 0
    %1617 = vmatprep.subr.bf16.mxu0 0
    %1618 = vmatpush1.bf16.msra.mxu0 0
    %1619 = vmatprep.subr.bf16.mxu0 0
    %1620 = vmatpush1.bf16.msra.mxu0 0
    %1621 = vmatprep.subr.bf16.mxu0 0
    %1622 = vmatpush1.bf16.msra.mxu0 0
    %1623 = vmatprep.mubr.bf16.mxu0 0
    %1624 = vmatmul.mubr.bf16.gmra.mrb[0].mxu0 %v1549
    %v1625 = vpop.f32.mrb[0].mxu0
    %v1626 = vadd.f32 0.0, %v1625
    %v1627 = vpop.f32.mrb[0].mxu0
    %v1628 = vpop.f32.mrb[0].mxu0
    %v1629 = vpop.f32.mrb[0].mxu0
    %1630 = vdwg.mxu0
    %v1631 = vadd.f32 %v1546, %v1585
    %v1632 = vadd.f32 %v1547, %v1587
    %v1633 = vxor.u32 %v1631, 2147483648
    %v1634 = vxor.u32 %v1632, 2147483648
    %v1635 = vmul.f32 %v1633, 1.442695
    %v1636 = vpow.pop %v1635
    %v1637 = vmul.f32 %v1634, 1.442695
    %v1638 = vpow.pop %v1637
    %v1639 = vadd.f32 %v1636, 1.0
    %v1640 = vadd.f32 %v1638, 1.0
    %v1641 = vrcp.pop %v1639
    %v1642 = vmul.f32 1.0, %v1641
    %v1643 = vrcp.pop %v1640
    %v1644 = vmul.f32 1.0, %v1643
    %v1645 = vadd.f32 %v1626, %v449
    %v1646 = vmul.f32 %v1642, %v1645
    %v1647 = vadd.f32 %v1548, %v1646
    %v1648 = vtanh.pop %v1647
    %v1649 = vsub.f32 1.0, %v1644
    %v1650 = vmul.f32 %v1649, %v1648
    %v1651 = vmul.f32 %v1644, %v1545
    %v1652 = vadd.f32 %v1650, %v1651
    %1653 = vst.msk [vmem:[#allocation3] sm:$0xff] %vm1219, %v1652
    %v1654 = vld [vmem:[#allocation2 + $0xf0] sm:$0xff]
    %v1655 = vld [vmem:[#allocation2 + $0xf8] sm:$0xff]
    %v1656 = vld [vmem:[#allocation2 + $0x100] sm:$0xff]
    %v1657 = vpack.c.bf16 %v1652, %v1652
    %1658 = vmatprep.subr.bf16.mxu0 %v534
    %1659 = vmatpush1.bf16.msra.mxu0 %v533
    %1660 = vmatprep.subr.bf16.mxu0 %v537
    %1661 = vmatpush1.bf16.msra.mxu0 %v536
    %1662 = vmatprep.subr.bf16.mxu0 %v540
    %1663 = vmatpush1.bf16.msra.mxu0 %v539
    %1664 = vmatprep.subr.bf16.mxu0 %v543
    %1665 = vmatpush1.bf16.msra.mxu0 %v542
    %1666 = vmatprep.subr.bf16.mxu0 %v546
    %1667 = vmatpush1.bf16.msra.mxu0 %v545
    %1668 = vmatprep.subr.bf16.mxu0 %v549
    %1669 = vmatpush1.bf16.msra.mxu0 %v548
    %1670 = vmatprep.subr.bf16.mxu0 %v552
    %1671 = vmatpush1.bf16.msra.mxu0 %v551
    %1672 = vmatprep.subr.bf16.mxu0 %v555
    %1673 = vmatpush1.bf16.msra.mxu0 %v554
    %1674 = vmatprep.subr.bf16.mxu0 0
    %1675 = vmatpush1.bf16.msra.mxu0 0
    %1676 = vmatprep.subr.bf16.mxu0 0
    %1677 = vmatpush1.bf16.msra.mxu0 0
    %1678 = vmatprep.subr.bf16.mxu0 0
    %1679 = vmatpush1.bf16.msra.mxu0 0
    %1680 = vmatprep.subr.bf16.mxu0 0
    %1681 = vmatpush1.bf16.msra.mxu0 0
    %1682 = vmatprep.subr.bf16.mxu0 0
    %1683 = vmatpush1.bf16.msra.mxu0 0
    %1684 = vmatprep.subr.bf16.mxu0 0
    %1685 = vmatpush1.bf16.msra.mxu0 0
    %1686 = vmatprep.subr.bf16.mxu0 0
    %1687 = vmatpush1.bf16.msra.mxu0 0
    %1688 = vmatprep.subr.bf16.mxu0 0
    %1689 = vmatpush1.bf16.msra.mxu0 0
    %1690 = vmatprep.mubr.bf16.mxu0 0
    %1691 = vmatmul.mubr.bf16.gmra.mrb[0].mxu0 %v1657
    %v1692 = vpop.f32.mrb[0].mxu0
    %v1693 = vadd.f32 0.0, %v1692
    %v1694 = vpop.f32.mrb[0].mxu0
    %v1695 = vadd.f32 0.0, %v1694
    %v1696 = vpop.f32.mrb[0].mxu0
    %v1697 = vpop.f32.mrb[0].mxu0
    %1698 = vdwg.mxu0
    %1699 = vmatprep.subr.bf16.mxu0 0
    %1700 = vmatpush1.bf16.msra.mxu0 %v535
    %1701 = vmatprep.subr.bf16.mxu0 0
    %1702 = vmatpush1.bf16.msra.mxu0 %v538
    %1703 = vmatprep.subr.bf16.mxu0 0
    %1704 = vmatpush1.bf16.msra.mxu0 %v541
    %1705 = vmatprep.subr.bf16.mxu0 0
    %1706 = vmatpush1.bf16.msra.mxu0 %v544
    %1707 = vmatprep.subr.bf16.mxu0 0
    %1708 = vmatpush1.bf16.msra.mxu0 %v547
    %1709 = vmatprep.subr.bf16.mxu0 0
    %1710 = vmatpush1.bf16.msra.mxu0 %v550
    %1711 = vmatprep.subr.bf16.mxu0 0
    %1712 = vmatpush1.bf16.msra.mxu0 %v553
    %1713 = vmatprep.subr.bf16.mxu0 0
    %1714 = vmatpush1.bf16.msra.mxu0 %v556
    %1715 = vmatprep.subr.bf16.mxu0 0
    %1716 = vmatpush1.bf16.msra.mxu0 0
    %1717 = vmatprep.subr.bf16.mxu0 0
    %1718 = vmatpush1.bf16.msra.mxu0 0
    %1719 = vmatprep.subr.bf16.mxu0 0
    %1720 = vmatpush1.bf16.msra.mxu0 0
    %1721 = vmatprep.subr.bf16.mxu0 0
    %1722 = vmatpush1.bf16.msra.mxu0 0
    %1723 = vmatprep.subr.bf16.mxu0 0
    %1724 = vmatpush1.bf16.msra.mxu0 0
    %1725 = vmatprep.subr.bf16.mxu0 0
    %1726 = vmatpush1.bf16.msra.mxu0 0
    %1727 = vmatprep.subr.bf16.mxu0 0
    %1728 = vmatpush1.bf16.msra.mxu0 0
    %1729 = vmatprep.subr.bf16.mxu0 0
    %1730 = vmatpush1.bf16.msra.mxu0 0
    %1731 = vmatprep.mubr.bf16.mxu0 0
    %1732 = vmatmul.mubr.bf16.gmra.mrb[0].mxu0 %v1657
    %v1733 = vpop.f32.mrb[0].mxu0
    %v1734 = vadd.f32 0.0, %v1733
    %v1735 = vpop.f32.mrb[0].mxu0
    %v1736 = vpop.f32.mrb[0].mxu0
    %v1737 = vpop.f32.mrb[0].mxu0
    %1738 = vdwg.mxu0
    %v1739 = vadd.f32 %v1654, %v1693
    %v1740 = vadd.f32 %v1655, %v1695
    %v1741 = vxor.u32 %v1739, 2147483648
    %v1742 = vxor.u32 %v1740, 2147483648
    %v1743 = vmul.f32 %v1741, 1.442695
    %v1744 = vpow.pop %v1743
    %v1745 = vmul.f32 %v1742, 1.442695
    %v1746 = vpow.pop %v1745
    %v1747 = vadd.f32 %v1744, 1.0
    %v1748 = vadd.f32 %v1746, 1.0
    %v1749 = vrcp.pop %v1747
    %v1750 = vmul.f32 1.0, %v1749
    %v1751 = vrcp.pop %v1748
    %v1752 = vmul.f32 1.0, %v1751
    %v1753 = vadd.f32 %v1734, %v449
    %v1754 = vmul.f32 %v1750, %v1753
    %v1755 = vadd.f32 %v1656, %v1754
    %v1756 = vtanh.pop %v1755
    %v1757 = vsub.f32 1.0, %v1752
    %v1758 = vmul.f32 %v1757, %v1756
    %v1759 = vmul.f32 %v1752, %v1652
    %v1760 = vadd.f32 %v1758, %v1759
    %1761 = vst.msk [vmem:[#allocation3] sm:$0xff] %vm1328, %v1760
    %v1762 = vld [vmem:[#allocation2 + $0x108] sm:$0xff]
    %v1763 = vld [vmem:[#allocation2 + $0x110] sm:$0xff]
    %v1764 = vld [vmem:[#allocation2 + $0x118] sm:$0xff]
    %v1765 = vpack.c.bf16 %v1760, %v1760
    %1766 = vmatprep.subr.bf16.mxu0 %v534
    %1767 = vmatpush1.bf16.msra.mxu0 %v533
    %1768 = vmatprep.subr.bf16.mxu0 %v537
    %1769 = vmatpush1.bf16.msra.mxu0 %v536
    %1770 = vmatprep.subr.bf16.mxu0 %v540
    %1771 = vmatpush1.bf16.msra.mxu0 %v539
    %1772 = vmatprep.subr.bf16.mxu0 %v543
    %1773 = vmatpush1.bf16.msra.mxu0 %v542
    %1774 = vmatprep.subr.bf16.mxu0 %v546
    %1775 = vmatpush1.bf16.msra.mxu0 %v545
    %1776 = vmatprep.subr.bf16.mxu0 %v549
    %1777 = vmatpush1.bf16.msra.mxu0 %v548
    %1778 = vmatprep.subr.bf16.mxu0 %v552
    %1779 = vmatpush1.bf16.msra.mxu0 %v551
    %1780 = vmatprep.subr.bf16.mxu0 %v555
    %1781 = vmatpush1.bf16.msra.mxu0 %v554
    %1782 = vmatprep.subr.bf16.mxu0 0
    %1783 = vmatpush1.bf16.msra.mxu0 0
    %1784 = vmatprep.subr.bf16.mxu0 0
    %1785 = vmatpush1.bf16.msra.mxu0 0
    %1786 = vmatprep.subr.bf16.mxu0 0
    %1787 = vmatpush1.bf16.msra.mxu0 0
    %1788 = vmatprep.subr.bf16.mxu0 0
    %1789 = vmatpush1.bf16.msra.mxu0 0
    %1790 = vmatprep.subr.bf16.mxu0 0
    %1791 = vmatpush1.bf16.msra.mxu0 0
    %1792 = vmatprep.subr.bf16.mxu0 0
    %1793 = vmatpush1.bf16.msra.mxu0 0
    %1794 = vmatprep.subr.bf16.mxu0 0
    %1795 = vmatpush1.bf16.msra.mxu0 0
    %1796 = vmatprep.subr.bf16.mxu0 0
    %1797 = vmatpush1.bf16.msra.mxu0 0
    %1798 = vmatprep.mubr.bf16.mxu0 0
    %1799 = vmatmul.mubr.bf16.gmra.mrb[0].mxu0 %v1765
    %v1800 = vpop.f32.mrb[0].mxu0
    %v1801 = vadd.f32 0.0, %v1800
    %v1802 = vpop.f32.mrb[0].mxu0
    %v1803 = vadd.f32 0.0, %v1802
    %v1804 = vpop.f32.mrb[0].mxu0
    %v1805 = vpop.f32.mrb[0].mxu0
    %1806 = vdwg.mxu0
    %1807 = vmatprep.subr.bf16.mxu0 0
    %1808 = vmatpush1.bf16.msra.mxu0 %v535
    %1809 = vmatprep.subr.bf16.mxu0 0
    %1810 = vmatpush1.bf16.msra.mxu0 %v538
    %1811 = vmatprep.subr.bf16.mxu0 0
    %1812 = vmatpush1.bf16.msra.mxu0 %v541
    %1813 = vmatprep.subr.bf16.mxu0 0
    %1814 = vmatpush1.bf16.msra.mxu0 %v544
    %1815 = vmatprep.subr.bf16.mxu0 0
    %1816 = vmatpush1.bf16.msra.mxu0 %v547
    %1817 = vmatprep.subr.bf16.mxu0 0
    %1818 = vmatpush1.bf16.msra.mxu0 %v550
    %1819 = vmatprep.subr.bf16.mxu0 0
    %1820 = vmatpush1.bf16.msra.mxu0 %v553
    %1821 = vmatprep.subr.bf16.mxu0 0
    %1822 = vmatpush1.bf16.msra.mxu0 %v556
    %1823 = vmatprep.subr.bf16.mxu0 0
    %1824 = vmatpush1.bf16.msra.mxu0 0
    %1825 = vmatprep.subr.bf16.mxu0 0
    %1826 = vmatpush1.bf16.msra.mxu0 0
    %1827 = vmatprep.subr.bf16.mxu0 0
    %1828 = vmatpush1.bf16.msra.mxu0 0
    %1829 = vmatprep.subr.bf16.mxu0 0
    %1830 = vmatpush1.bf16.msra.mxu0 0
    %1831 = vmatprep.subr.bf16.mxu0 0
    %1832 = vmatpush1.bf16.msra.mxu0 0
    %1833 = vmatprep.subr.bf16.mxu0 0
    %1834 = vmatpush1.bf16.msra.mxu0 0
    %1835 = vmatprep.subr.bf16.mxu0 0
    %1836 = vmatpush1.bf16.msra.mxu0 0
    %1837 = vmatprep.subr.bf16.mxu0 0
    %1838 = vmatpush1.bf16.msra.mxu0 0
    %1839 = vmatprep.mubr.bf16.mxu0 0
    %1840 = vmatmul.mubr.bf16.gmra.mrb[0].mxu0 %v1765
    %v1841 = vpop.f32.mrb[0].mxu0
    %v1842 = vadd.f32 0.0, %v1841
    %v1843 = vpop.f32.mrb[0].mxu0
    %v1844 = vpop.f32.mrb[0].mxu0
    %v1845 = vpop.f32.mrb[0].mxu0
    %1846 = vdwg.mxu0
    %v1847 = vadd.f32 %v1762, %v1801
    %v1848 = vadd.f32 %v1763, %v1803
    %v1849 = vxor.u32 %v1847, 2147483648
    %v1850 = vxor.u32 %v1848, 2147483648
    %v1851 = vmul.f32 %v1849, 1.442695
    %v1852 = vpow.pop %v1851
    %v1853 = vmul.f32 %v1850, 1.442695
    %v1854 = vpow.pop %v1853
    %v1855 = vadd.f32 %v1852, 1.0
    %v1856 = vadd.f32 %v1854, 1.0
    %v1857 = vrcp.pop %v1855
    %v1858 = vmul.f32 1.0, %v1857
    %v1859 = vrcp.pop %v1856
    %v1860 = vmul.f32 1.0, %v1859
    %v1861 = vadd.f32 %v1842, %v449
    %v1862 = vmul.f32 %v1858, %v1861
    %v1863 = vadd.f32 %v1764, %v1862
    %v1864 = vtanh.pop %v1863
    %v1865 = vsub.f32 1.0, %v1860
    %v1866 = vmul.f32 %v1865, %v1864
    %v1867 = vmul.f32 %v1860, %v1760
    %v1868 = vadd.f32 %v1866, %v1867
    %1869 = vst.msk [vmem:[#allocation3] sm:$0xff] %vm1437, %v1868
    %v1870 = vld [vmem:[#allocation3] sm:$0xff]
    %v1871 = vld [vmem:[#allocation3 + $0x8] sm:$0xff]
    %v1872 = vld [vmem:[%s3] sm:$0xff]
    %v1873 = vld [vmem:[%s3 + $0x8] sm:$0xff]
    %v1874 = vld [vmem:[%s3 + $0x10] sm:$0xff]
    %v1875 = vld [vmem:[%s3 + $0x18] sm:$0xff]
    %v1876 = vld [vmem:[%s3 + $0x20] sm:$0xff]
    %v1877 = vld [vmem:[%s3 + $0x28] sm:$0xff]
    %v1878 = vld [vmem:[%s3 + $0x30] sm:$0xff]
    %v1879 = vld [vmem:[%s3 + $0x38] sm:$0xff]
    %v1880 = vld [vmem:[%s3 + $0x40] sm:$0xff]
    %v1881 = vld [vmem:[%s3 + $0x48] sm:$0xff]
    %v1882 = vld [vmem:[%s3 + $0x50] sm:$0xff]
    %v1883 = vld [vmem:[%s3 + $0x58] sm:$0xff]
    %v1884 = vld [vmem:[%s3 + $0x60] sm:$0xff]
    %v1885 = vld [vmem:[%s3 + $0x68] sm:$0xff]
    %v1886 = vld [vmem:[%s3 + $0x70] sm:$0xff]
    %v1887 = vld [vmem:[%s3 + $0x78] sm:$0xff]
    %v1888 = vld [vmem:[%s3 + $0x80] sm:$0x1]
    %v1889 = vlaneseq
    %v1890 = vshrl.u32 %v1889, 7
    %v1891 = vsub.s32 0, %v1890
    %v1892 = vrot.slane %v1888, %v1891
    %1893 = vmatprep.subr.mxu0 0.0
    %1894 = vmatpush1.msra.mxu0 %v1872
    %1895 = vmatprep.subr.mxu0 0.0
    %1896 = vmatpush1.msra.mxu0 %v1873
    %1897 = vmatprep.subr.mxu0 0.0
    %1898 = vmatpush1.msra.mxu0 %v1874
    %1899 = vmatprep.subr.mxu0 0.0
    %1900 = vmatpush1.msra.mxu0 %v1875
    %1901 = vmatprep.subr.mxu0 0.0
    %1902 = vmatpush1.msra.mxu0 %v1876
    %1903 = vmatprep.subr.mxu0 0.0
    %1904 = vmatpush1.msra.mxu0 %v1877
    %1905 = vmatprep.subr.mxu0 0.0
    %1906 = vmatpush1.msra.mxu0 %v1878
    %1907 = vmatprep.subr.mxu0 0.0
    %1908 = vmatpush1.msra.mxu0 %v1879
    %1909 = vmatprep.subr.mxu0 0.0
    %1910 = vmatpush1.msra.mxu0 %v1880
    %1911 = vmatprep.subr.mxu0 0.0
    %1912 = vmatpush1.msra.mxu0 %v1881
    %1913 = vmatprep.subr.mxu0 0.0
    %1914 = vmatpush1.msra.mxu0 %v1882
    %1915 = vmatprep.subr.mxu0 0.0
    %1916 = vmatpush1.msra.mxu0 %v1883
    %1917 = vmatprep.subr.mxu0 0.0
    %1918 = vmatpush1.msra.mxu0 %v1884
    %1919 = vmatprep.subr.mxu0 0.0
    %1920 = vmatpush1.msra.mxu0 %v1885
    %1921 = vmatprep.subr.mxu0 0.0
    %1922 = vmatpush1.msra.mxu0 %v1886
    %1923 = vmatprep.subr.mxu0 0.0
    %1924 = vmatpush1.msra.mxu0 %v1887
    %1925 = vmatprep.subr.mxu0 0.0
    %1926 = vmatpush1.msra.mxu0 0.0
    %1927 = vmatprep.subr.mxu0 0.0
    %1928 = vmatpush1.msra.mxu0 0.0
    %1929 = vmatprep.subr.mxu0 0.0
    %1930 = vmatpush1.msra.mxu0 0.0
    %1931 = vmatprep.subr.mxu0 0.0
    %1932 = vmatpush1.msra.mxu0 0.0
    %1933 = vmatprep.subr.mxu0 0.0
    %1934 = vmatpush1.msra.mxu0 0.0
    %1935 = vmatprep.subr.mxu0 0.0
    %1936 = vmatpush1.msra.mxu0 0.0
    %1937 = vmatprep.subr.mxu0 0.0
    %1938 = vmatpush1.msra.mxu0 0.0
    %1939 = vmatprep.subr.mxu0 0.0
    %1940 = vmatpush1.msra.mxu0 0.0
    %1941 = vmatprep.subr.mxu0 0.0
    %1942 = vmatpush1.msra.mxu0 0.0
    %1943 = vmatprep.subr.mxu0 0.0
    %1944 = vmatpush1.msra.mxu0 0.0
    %1945 = vmatprep.subr.mxu0 0.0
    %1946 = vmatpush1.msra.mxu0 0.0
    %1947 = vmatprep.subr.mxu0 0.0
    %1948 = vmatpush1.msra.mxu0 0.0
    %1949 = vmatprep.subr.mxu0 0.0
    %1950 = vmatpush1.msra.mxu0 0.0
    %1951 = vmatprep.subr.mxu0 0.0
    %1952 = vmatpush1.msra.mxu0 0.0
    %1953 = vmatprep.subr.mxu0 0.0
    %1954 = vmatpush1.msra.mxu0 0.0
    %1955 = vmatprep.subr.mxu0 0.0
    %1956 = vmatpush1.msra.mxu0 0.0
    %1957 = vmatprep.mubr.f32.mxu0 0.0
    %1958 = vmatmul.mubr.f32.gmra.mrb[0].mxu0 %v1870
    %v1959 = vpop.f32.mrb[0].mxu0
    %v1960 = vadd.f32 %v1892, %v1959
    %v1961 = vpop.f32.mrb[0].mxu0
    %1962 = vmatprep.mubr.f32.mxu0 0.0
    %1963 = vmatmul.mubr.f32.gmra.mrb[0].mxu0 %v1871
    %v1964 = vpop.f32.mrb[0].mxu0
    %v1965 = vadd.f32 %v1892, %v1964
    %v1966 = vpop.f32.mrb[0].mxu0
    %1967 = vdwg.mxu0
    %1968 = vst [vmem:[#allocation9] sm:$0xff] %v1960
    %1969 = vst [vmem:[#allocation9 + $0x8] sm:$0xff] %v1965
    // Predicated region
    $region26: #{tpu_custom_call.1} parent=1 // pred_check
      _
    $region27: #{tpu_custom_call.1} parent=1 // pred_check_branch
      %1971 = sbr.rel (0) target = $region29
    $region28: #{tpu_custom_call.1} parent=1 // pred_region
      %s1973 = ssub.s32 256, 256
      %1974 = vsyncadd [#allocation6], %s1973
      %s1975 = sshll.u32 [#allocation9], 4
      %s1976 = int_to_ptr.vmem [resolvable:$true] %s1975
      %1981 = dma.vmem_to_hbm [thread:$0]  %s1976, 256, %s4, [#allocation6], 128, 128, 8
    $region29: #{tpu_custom_call.1} parent=1 // pred_fallthru
      _
    // Predicated region
    $region30: #{tpu_custom_call.1} parent=1 // pred_check
      _
    $region31: #{tpu_custom_call.1} parent=1 // pred_check_branch
      %1983 = sbr.rel (0) target = $region33
    $region32: #{tpu_custom_call.1} parent=1 // pred_region
      %1984 = dma.done [#allocation6], 256
    $region33: #{tpu_custom_call.1} parent=1 // pred_fallthru
      _
    %1985 = vsyncpa [#allocation5], 1
    %1986 = vsyncpa [#allocation8], 1
    %1987 = vsyncpa [#allocation6], 1

</llo_original>
